<compile_context>
chip_gen: v6e
topology: v6e:2x2x1
jax: 0.10.0
libtpu: 0.0.40
codegen_flags: <defaults>
</compile_context>

<pallas_src>
import math
import functools

import jax
import jax.numpy as jnp
from jax import lax
from jax.experimental import pallas as pl
from jax.experimental.pallas import tpu as pltpu


def _dcf_db_fused_kernel(half_ids_ref, x_ref, w_ref, b_ref, o_ref, *,
                         C, K, Ho, Wo, stride, Bt, out_ch):
    """One grid step: Bt batch elements, one im2col + one MXU matmul each.

    half_ids_ref: (num_tiles,) SMEM      scalar-prefetch table (consumed by index_maps)
    x_ref:        (Bt, C, Hp, Wp)        padded input tile
    w_ref:        (1, out_ch, K*K*C)     folded im2col weights for this batch half
    b_ref:        (out_ch, 1)            bias
    o_ref:        (Bt, out_ch, Ho*Wo)    lane-dense output tile
    """
    del half_ids_ref  # only used by the index_maps
    HW = Ho * Wo

    # loop-invariant: hoisted out of the per-batch-element loop
    w = w_ref[0].astype(jnp.float32)                      # (out_ch, K*K*C)
    b = b_ref[...]                                        # (out_ch, 1), lane-broadcast

    for bi in range(Bt):                                  # small static unroll
        xb = x_ref[bi].astype(jnp.float32)                # (C, Hp, Wp)

        # Build the im2col matrix in VMEM: rows ordered [tap, channel] to match w.
        patches = []
        for dy in range(K):
            for dx in range(K):
                p = lax.slice(
                    xb,
                    (0, dy, dx),
                    (C, dy + (Ho - 1) * stride + 1, dx + (Wo - 1) * stride + 1),
                    (1, stride, stride),
                )                                          # (C, Ho, Wo)
                patches.append(p.reshape(C, HW))
        col = jnp.concatenate(patches, axis=0)             # (K*K*C, HW)

        res = jnp.dot(w, col, preferred_element_type=jnp.float32)   # (out_ch, HW)
        o_ref[bi] = (res + b).astype(o_ref.dtype)


def conv_dcf_db(x, bases0, bases1, weight, bias, *, stride=1, padding=0,
                batch_tile=None):
    """x: (B, C, H, W); bases{0,1}: (NB, 1, K, K); weight: (out_ch, C*NB); bias: (out_ch,)."""
    B, C, H, W = x.shape
    NB, _, K, _ = bases0.shape
    out_ch = weight.shape[0]
    assert B >= 1, "empty batch not supported"
    KK = K * K
    Ho = (H + 2 * padding - K) // stride + 1
    Wo = (W + 2 * padding - K) // stride + 1
    HW = Ho * Wo
    n0 = B // 2          # torch forward: first half -> bases0, second half -> bases1
    n1 = B - n0

    # ---- fold bases into im2col weights (tiny, exact f32) --------------------
    # w_fold[h, o, t*C + c] = sum_m weight[o, c*NB + m] * bases_h[m, t]
    w3 = weight.reshape(out_ch, C, NB).astype(jnp.float32)                 # (O, C, NB)
    bset = jnp.stack([bases0[:, 0].reshape(NB, KK),
                      bases1[:, 0].reshape(NB, KK)], axis=0)               # (2, NB, KK)
    w_fold = jnp.einsum('ocn,hnt->hotc', w3, bset.astype(jnp.float32),
                        precision=lax.Precision.HIGHEST)                   # (2, O, KK, C)
    w_fold = w_fold.reshape(2, out_ch, KK * C)                             # (2, O, KK*C)

    bias2d = bias.reshape(out_ch, 1).astype(jnp.float32)

    # ---- spatial zero-padding (wrapper glue) ---------------------------------
    x_pad = jnp.pad(x, ((0, 0), (0, 0), (padding, padding), (padding, padding)))
    Hp, Wp = x_pad.shape[2], x_pad.shape[3]

    # ---- batch tiling: Bt must divide both halves so no tile straddles the
    #      bases0/bases1 split --------------------------------------------------
    g = math.gcd(n0, n1) if min(n0, n1) > 0 else max(n0, n1)
    if batch_tile is None:
        batch_tile = 1
        for d in range(min(8, g), 0, -1):
            if g % d == 0:
                batch_tile = d
                break
    Bt = batch_tile
    assert n0 % Bt == 0 and n1 % Bt == 0 and B % Bt == 0
    num_tiles = B // Bt
    # half id per grid tile: 0 -> bases0-folded weights, 1 -> bases1-folded weights
    half_ids = (jnp.arange(num_tiles, dtype=jnp.int32) >= (n0 // Bt)).astype(jnp.int32)

    kernel = functools.partial(
        _dcf_db_fused_kernel,
        C=C, K=K, Ho=Ho, Wo=Wo, stride=stride, Bt=Bt, out_ch=out_ch)

    out_flat = pl.pallas_call(
        kernel,
        out_shape=jax.ShapeDtypeStruct((B, out_ch, HW), x.dtype),
        grid_spec=pltpu.PrefetchScalarGridSpec(
            num_scalar_prefetch=1,
            grid=(num_tiles,),
            in_specs=[
                pl.BlockSpec((Bt, C, Hp, Wp), lambda t, half_ids: (t, 0, 0, 0)),
                pl.BlockSpec((1, out_ch, KK * C),
                             lambda t, half_ids: (half_ids[t], 0, 0)),
                pl.BlockSpec((out_ch, 1), lambda t, half_ids: (0, 0)),
            ],
            out_specs=pl.BlockSpec((Bt, out_ch, HW),
                                   lambda t, half_ids: (t, 0, 0)),
        ),
        compiler_params=pltpu.CompilerParams(
            dimension_semantics=("parallel",),
            # fits v7x's 64 MiB physical VMEM; v5e/v6e (128 MiB) have headroom
            vmem_limit_bytes=32 * 1024 * 1024,
        ),
    )(half_ids, x_pad, w_fold, bias2d)

    return out_flat.reshape(B, out_ch, Ho, Wo)


def _reference(x, bases0, bases1, weight, bias, *, stride, padding):
    """Pure-JAX replica of the PyTorch forward (for correctness checking)."""
    B, C, H, W = x.shape
    NB, _, K, _ = bases0.shape
    n0 = B // 2

    def half(xh, bases):
        bh = xh.shape[0]
        xh = xh.reshape(bh * C, 1, H, W)
        f = lax.conv_general_dilated(
            xh, bases, (stride, stride), [(padding, padding)] * 2,
            dimension_numbers=("NCHW", "OIHW", "NCHW"))
        return f.reshape(bh, C * NB, f.shape[2], f.shape[3])

    feat = jnp.concatenate([half(x[:n0], bases0), half(x[n0:], bases1)], axis=0)
    w4 = weight.reshape(weight.shape[0], C * NB, 1, 1)
    out = lax.conv_general_dilated(
        feat, w4, (1, 1), [(0, 0)] * 2,
        dimension_numbers=("NCHW", "OIHW", "NCHW"))
    return out + bias.reshape(1, -1, 1, 1)


if __name__ == "__main__":
    # Small shapes consistent with the module: batch=2 (split into halves of 1),
    # in_channels=4, spatial 16x16, kernel_size=3, num_bases=6, out_channels=8.
    B, C, H, W = 2, 4, 16, 16
    K, NB, OUT = 3, 6, 8
    stride, padding = 1, 1

    key = jax.random.PRNGKey(0)
    kx, kb0, kb1, kw, kbias = jax.random.split(key, 5)

    x = jax.random.normal(kx, (B, C, H, W), dtype=jnp.float32)

    # 'random' initializer semantics: uniform[-0.5, 0.5) bases; drawn separately to
    # exercise the dual-bases batch routing.
    bases0 = jax.random.uniform(kb0, (NB, 1, K, K), jnp.float32) - 0.5
    bases1 = jax.random.uniform(kb1, (NB, 1, K, K), jnp.float32) - 0.5

    stdv = 1.0 / math.sqrt(C * NB)
    weight = jax.random.uniform(kw, (OUT, C * NB), jnp.float32, -stdv, stdv)
    bias = jax.random.uniform(kbias, (OUT,), jnp.float32, -stdv, stdv)

    out = conv_dcf_db(x, bases0, bases1, weight, bias,
                      stride=stride, padding=padding)
    out = jax.block_until_ready(out)

    ref = _reference(x, bases0, bases1, weight, bias,
                     stride=stride, padding=padding)
    assert out.shape == ref.shape, (out.shape, ref.shape)
    assert jnp.allclose(out, ref, atol=1e-4, rtol=1e-4), \
        float(jnp.max(jnp.abs(out - ref)))

    print("KERNEL_OK")
</pallas_src>

<mosaic_0001>
module attributes {stable_mosaic.version = 11 : i64} {
  func.func @_dcf_db_fused_kernel(%arg0: i32, %arg1: memref<2xi32, #tpu.memory_space<smem>>, %arg2: memref<1x4x18x18xf32, #tpu.memory_space<vmem>>, %arg3: memref<1x8x36xf32, #tpu.memory_space<vmem>>, %arg4: memref<8x1xf32, #tpu.memory_space<vmem>>, %arg5: memref<1x8x256xf32, #tpu.memory_space<vmem>>) attributes {dimension_semantics = [#tpu.dimension_semantics<parallel>], iteration_bounds = array<i64: 2>, scalar_prefetch = 1 : i64, scratch_operands = 0 : i64, tpu.core_type = #tpu.core_type<tc>, window_params = [{transform_indices = @transform_0, window_bounds = array<i64: 1, 4, 18, 18>}, {transform_indices = @transform_1, window_bounds = array<i64: 1, 8, 36>}, {pipeline_mode = #tpu.pipeline_mode<synchronous>, transform_indices = @transform_2, window_bounds = array<i64: 8, 1>}, {transform_indices = @transform_3, window_bounds = array<i64: 1, 8, 256>}]} {
    %c0 = arith.constant 0 : index
    %c0_0 = arith.constant 0 : index
    %c0_1 = arith.constant 0 : index
    %0 = vector.load %arg3[%c0, %c0_0, %c0_1] : memref<1x8x36xf32, #tpu.memory_space<vmem>>, vector<1x8x36xf32>
    %1 = vector.shape_cast %0 : vector<1x8x36xf32> to vector<8x36xf32>
    %c0_2 = arith.constant 0 : index
    %c0_3 = arith.constant 0 : index
    %2 = vector.load %arg4[%c0_2, %c0_3] : memref<8x1xf32, #tpu.memory_space<vmem>>, vector<8x1xf32>
    %c0_4 = arith.constant 0 : index
    %c0_5 = arith.constant 0 : index
    %c0_6 = arith.constant 0 : index
    %c0_7 = arith.constant 0 : index
    %3 = vector.load %arg2[%c0_4, %c0_5, %c0_6, %c0_7] : memref<1x4x18x18xf32, #tpu.memory_space<vmem>>, vector<1x4x18x18xf32>
    %4 = vector.shape_cast %3 : vector<1x4x18x18xf32> to vector<4x18x18xf32>
    %5 = vector.extract_strided_slice %4 {offsets = [0, 0, 0], sizes = [4, 16, 16], strides = [1, 1, 1]} : vector<4x18x18xf32> to vector<4x16x16xf32>
    %6 = vector.shape_cast %5 : vector<4x16x16xf32> to vector<4x256xf32>
    %7 = vector.extract_strided_slice %4 {offsets = [0, 0, 1], sizes = [4, 16, 16], strides = [1, 1, 1]} : vector<4x18x18xf32> to vector<4x16x16xf32>
    %8 = vector.shape_cast %7 : vector<4x16x16xf32> to vector<4x256xf32>
    %9 = vector.extract_strided_slice %4 {offsets = [0, 0, 2], sizes = [4, 16, 16], strides = [1, 1, 1]} : vector<4x18x18xf32> to vector<4x16x16xf32>
    %10 = vector.shape_cast %9 : vector<4x16x16xf32> to vector<4x256xf32>
    %11 = vector.extract_strided_slice %4 {offsets = [0, 1, 0], sizes = [4, 16, 16], strides = [1, 1, 1]} : vector<4x18x18xf32> to vector<4x16x16xf32>
    %12 = vector.shape_cast %11 : vector<4x16x16xf32> to vector<4x256xf32>
    %13 = vector.extract_strided_slice %4 {offsets = [0, 1, 1], sizes = [4, 16, 16], strides = [1, 1, 1]} : vector<4x18x18xf32> to vector<4x16x16xf32>
    %14 = vector.shape_cast %13 : vector<4x16x16xf32> to vector<4x256xf32>
    %15 = vector.extract_strided_slice %4 {offsets = [0, 1, 2], sizes = [4, 16, 16], strides = [1, 1, 1]} : vector<4x18x18xf32> to vector<4x16x16xf32>
    %16 = vector.shape_cast %15 : vector<4x16x16xf32> to vector<4x256xf32>
    %17 = vector.extract_strided_slice %4 {offsets = [0, 2, 0], sizes = [4, 16, 16], strides = [1, 1, 1]} : vector<4x18x18xf32> to vector<4x16x16xf32>
    %18 = vector.shape_cast %17 : vector<4x16x16xf32> to vector<4x256xf32>
    %19 = vector.extract_strided_slice %4 {offsets = [0, 2, 1], sizes = [4, 16, 16], strides = [1, 1, 1]} : vector<4x18x18xf32> to vector<4x16x16xf32>
    %20 = vector.shape_cast %19 : vector<4x16x16xf32> to vector<4x256xf32>
    %21 = vector.extract_strided_slice %4 {offsets = [0, 2, 2], sizes = [4, 16, 16], strides = [1, 1, 1]} : vector<4x18x18xf32> to vector<4x16x16xf32>
    %22 = vector.shape_cast %21 : vector<4x16x16xf32> to vector<4x256xf32>
    %23 = tpu.concatenate %6, %8, %10, %12, %14, %16, %18, %20, %22 in 0 : vector<4x256xf32>, vector<4x256xf32>, vector<4x256xf32>, vector<4x256xf32>, vector<4x256xf32>, vector<4x256xf32>, vector<4x256xf32>, vector<4x256xf32>, vector<4x256xf32> -> vector<36x256xf32>
    %cst = arith.constant dense<0.000000e+00> : vector<8x256xf32>
    %24 = tpu.matmul %1, %23, %cst {dimension_numbers = #tpu.dot_dimension_numbers<[1], [0], [0], [1], [0, 0, 1, 1], [], []>} : vector<8x36xf32>, vector<36x256xf32>, vector<8x256xf32> -> vector<8x256xf32>
    %25 = vector.broadcast %2 : vector<8x1xf32> to vector<8x256xf32>
    %26 = arith.addf %24, %25 : vector<8x256xf32>
    %c0_8 = arith.constant 0 : index
    %c0_9 = arith.constant 0 : index
    %c0_10 = arith.constant 0 : index
    %27 = vector.load %arg5[%c0_8, %c0_9, %c0_10] : memref<1x8x256xf32, #tpu.memory_space<vmem>>, vector<1x8x256xf32>
    %28 = vector.shape_cast %27 : vector<1x8x256xf32> to vector<8x256xf32>
    %29 = vector.shape_cast %26 : vector<8x256xf32> to vector<1x8x256xf32>
    tpu.vector_store %arg5[%c0_8, %c0_9, %c0_10], %29 {strides = array<i32>} : memref<1x8x256xf32, #tpu.memory_space<vmem>>, vector<1x8x256xf32>,
    return
  }
  func.func @transform_0(%arg0: i32, %arg1: memref<2xi32, #tpu.memory_space<smem>>) -> (i32, i32, i32, i32) {
    %c0_i32 = arith.constant 0 : i32
    %c0_i32_0 = arith.constant 0 : i32
    %c0_i32_1 = arith.constant 0 : i32
    %c0_i32_2 = arith.constant 0 : i32
    return %arg0, %c0_i32, %c0_i32_0, %c0_i32_1 : i32, i32, i32, i32
  }
  func.func @transform_1(%arg0: i32, %arg1: memref<2xi32, #tpu.memory_space<smem>>) -> (i32, i32, i32) {
    %0 = arith.index_cast %arg0 : i32 to index
    %1 = memref.load %arg1[%0] : memref<2xi32, #tpu.memory_space<smem>>
    %c0_i32 = arith.constant 0 : i32
    %c0_i32_0 = arith.constant 0 : i32
    %c0_i32_1 = arith.constant 0 : i32
    return %1, %c0_i32, %c0_i32_0 : i32, i32, i32
  }
  func.func @transform_2(%arg0: i32, %arg1: memref<2xi32, #tpu.memory_space<smem>>) -> (i32, i32) {
    %c0_i32 = arith.constant 0 : i32
    %c0_i32_0 = arith.constant 0 : i32
    %c0_i32_1 = arith.constant 0 : i32
    return %c0_i32, %c0_i32_0 : i32, i32
  }
  func.func @transform_3(%arg0: i32, %arg1: memref<2xi32, #tpu.memory_space<smem>>) -> (i32, i32, i32) {
    %c0_i32 = arith.constant 0 : i32
    %c0_i32_0 = arith.constant 0 : i32
    %c0_i32_1 = arith.constant 0 : i32
    return %arg0, %c0_i32, %c0_i32_0 : i32, i32, i32
  }
}

</mosaic_0001>

<llo_original>
// kernel: tpu_custom_call.1
$region0: #{tpu_custom_call.1}
  #allocation0 [shape = 'u32[]', space=smem, size = 0x4, offset = 0x4, fixed_abs, tag = 'smem constant byte address 0x4 - core index']
  #allocation1 [shape = 'u32[144,128]{1,0:T(1,128)}', space=vmem, size = 0x12000, scoped, tag = 'internal scratch']
  #allocation2 [shape = 's32[1]{0}', space=sflag, size = 0x4, scoped, tag = 'scoped memory for tpu_custom_call.1']
  #allocation3 [shape = 'u8[512]{0}', space=smem, size = 0x200, scoped, tag = 'prefetched SMEM operand 0']
  %s0 = inlined_call_operand.vmem [shape: s32[2], index: 0, kind: input, shape index: {}]
  %s1 = inlined_call_operand.vmem [shape: f32[2,4,18,18], index: 1, kind: input, shape index: {}]
  %s2 = inlined_call_operand.vmem [shape: f32[2,8,36], index: 2, kind: input, shape index: {}]
  %s3 = inlined_call_operand.vmem [shape: f32[8,1], index: 3, kind: input, shape index: {}]
  %s4 = inlined_call_operand.hbm [shape: f32[2,8,256], index: 4, kind: output, shape index: {}]
  %s5 = sld [smem:[#allocation0]]
  $region45: #{tpu_custom_call.1} parent=0
    _
  %s7 = ssub.s32 1, %s5
  %s8 = scalar_select 0, %s7, %s5
  %s9 = sshll.u32 %s0, 4
  %s10 = int_to_ptr.vmem [resolvable:$true] %s9
  %12 = dma.vmem_to_smem %s10, 16, [#allocation3], [#allocation2]
  %13 = dma.done [#allocation2], 16
  %14 = sfence
  $region1: #{tpu_custom_call.1} parent=0
    #allocation4 [shape = 'u8[16384]{0}', space=vmem, size = 0x4000, scoped, tag = 'output window, operand 0']
    #allocation5 [shape = 's32[2]{0}', space=sflag, size = 0x8, scoped, tag = 'scoped memory for tpu_custom_call.1']
    %15 = vsyncpa [#allocation5], 0
    %s16 = scalar_lea.sflag [#allocation5], 1
    %17 = vsyncpa %s16, 0
    loop: start=0, step=1, limit=4
    $region2: #{tpu_custom_call.1} parent=1 // loop_pre_header
      _
    $region3: #{tpu_custom_call.1} parent=1 // loop_header
      %s19 = sphi 0, %s23
      %p20 = scmp.ge.s32.totalorder %s19, 4
      %s29 = sphi 0, %s31
      %s32 = sphi 0, %s29
      %s33 = sphi 0, %s32
      %s49 = sphi 0, %s33
      %s57 = sphi 0, %s59
      %s60 = sphi 0, %s57
      %s61 = sphi 0, %s60
      %s77 = sphi 0, %s61
      %s81 = sphi 0, %s81
      %s83 = sphi 0, %s81
      %s84 = sphi 0, %s83
      %s98 = sphi 0, %s84
      %s104 = sphi 0, %s106
      %s107 = sphi 0, %s104
      %s108 = sphi 0, %s107
      %s124 = sphi 0, %s108
    $region4: #{tpu_custom_call.1} parent=1 // loop_header_branch
      %22 = sbr.rel (%p20) target = $region8
    $region5: #{tpu_custom_call.1} parent=1 // loop_body
      %s24 = ssub.s32 %s19, 1
      %s25 = ssub.s32 %s19, 2
      %s26 = sadd.s32 %s19, 1
      %s27 = ssub.s32 %s19, %s26
      %p28 = scmp.eq.s32.totalorder %s27, 0
      %s30 = sadd.s32 %s29, 1
      %s31 = scalar_select %p28, %s29, %s30
      %p34 = pneg %p28
      %p35 = scmp.eq.s32.totalorder %s19, 1
      %p36 = por %p34, %p35
      %p37 = scmp.ne.s32.totalorder %s29, %s32
      %p38 = scmp.eq.s32.totalorder %s19, 0
      %p39 = por %p37, %p38
      %p40 = scmp.ne.s32.totalorder %s29, %s32
      %p41 = scmp.eq.s32.totalorder %s24, 1
      %p42 = por %p40, %p41
      %p43 = scmp.ne.s32.totalorder %s32, %s33
      %p44 = scmp.eq.s32.totalorder %s24, 0
      %p45 = por %p43, %p44
      %p46 = scmp.ne.s32.totalorder %s32, %s33
      %p47 = scmp.eq.s32.totalorder %s25, 1
      %p48 = por %p46, %p47
      %p50 = scmp.ne.s32.totalorder %s33, %s49
      %p51 = scmp.eq.s32.totalorder %s25, 0
      %p52 = por %p50, %p51
      %s53 = sld [smem:[#allocation3 + %s19]]
      %s54 = sld [smem:[#allocation3 + %s26]]
      %s55 = ssub.s32 %s53, %s54
      %p56 = scmp.eq.s32.totalorder %s55, 0
      %s58 = sadd.s32 %s57, 1
      %s59 = scalar_select %p56, %s57, %s58
      %p62 = pneg %p56
      %p63 = scmp.eq.s32.totalorder %s19, 1
      %p64 = por %p62, %p63
      %p65 = scmp.ne.s32.totalorder %s57, %s60
      %p66 = scmp.eq.s32.totalorder %s19, 0
      %p67 = por %p65, %p66
      %p68 = scmp.ne.s32.totalorder %s57, %s60
      %p69 = scmp.eq.s32.totalorder %s24, 1
      %p70 = por %p68, %p69
      %p71 = scmp.ne.s32.totalorder %s60, %s61
      %p72 = scmp.eq.s32.totalorder %s24, 0
      %p73 = por %p71, %p72
      %p74 = scmp.ne.s32.totalorder %s60, %s61
      %p75 = scmp.eq.s32.totalorder %s25, 1
      %p76 = por %p74, %p75
      %p78 = scmp.ne.s32.totalorder %s61, %s77
      %p79 = scmp.eq.s32.totalorder %s25, 0
      %p80 = por %p78, %p79
      %s82 = sadd.s32 %s81, 1
      %p85 = scmp.eq.s32.totalorder %s19, 1
      %p86 = scmp.ne.s32.totalorder %s81, %s83
      %p87 = scmp.eq.s32.totalorder %s19, 0
      %p88 = por %p86, %p87
      %p89 = scmp.ne.s32.totalorder %s81, %s83
      %p90 = scmp.eq.s32.totalorder %s24, 1
      %p91 = por %p89, %p90
      %p92 = scmp.ne.s32.totalorder %s83, %s84
      %p93 = scmp.eq.s32.totalorder %s24, 0
      %p94 = por %p92, %p93
      %p95 = scmp.ne.s32.totalorder %s83, %s84
      %p96 = scmp.eq.s32.totalorder %s25, 1
      %p97 = por %p95, %p96
      %p99 = scmp.ne.s32.totalorder %s84, %s98
      %p100 = scmp.eq.s32.totalorder %s25, 0
      %p101 = por %p99, %p100
      %s102 = ssub.s32 %s19, %s26
      %p103 = scmp.eq.s32.totalorder %s102, 0
      %s105 = sadd.s32 %s104, 1
      %s106 = scalar_select %p103, %s104, %s105
      %p109 = pneg %p103
      %p110 = scmp.eq.s32.totalorder %s19, 1
      %p111 = por %p109, %p110
      %p112 = scmp.ne.s32.totalorder %s104, %s107
      %p113 = scmp.eq.s32.totalorder %s19, 0
      %p114 = por %p112, %p113
      %p115 = scmp.ne.s32.totalorder %s104, %s107
      %p116 = scmp.eq.s32.totalorder %s24, 1
      %p117 = por %p115, %p116
      %p118 = scmp.ne.s32.totalorder %s107, %s108
      %p119 = scmp.eq.s32.totalorder %s24, 0
      %p120 = por %p118, %p119
      %p121 = scmp.ne.s32.totalorder %s107, %s108
      %p122 = scmp.eq.s32.totalorder %s25, 1
      %p123 = por %p121, %p122
      %p125 = scmp.ne.s32.totalorder %s108, %s124
      %p126 = scmp.eq.s32.totalorder %s25, 0
      %p127 = por %p125, %p126
      %p128 = scmp.le.s32.totalorder 1, %s19
      %p129 = scmp.lt.s32.totalorder %s19, 3
      %p130 = pnand %p128, %p129
      %p131 = pneg %p130
      // Predicated region
      $region9: #{tpu_custom_call.1} parent=5 // pred_check
        _
      $region10: #{tpu_custom_call.1} parent=5 // pred_check_branch
        %133 = sbr.rel (%p130) target = $region12
      $region11: #{tpu_custom_call.1} parent=5 // pred_region
        %s134 = ssub.s32 %s19, 1
        // Predicated region
        $region13: #{tpu_custom_call.1} parent=11 // pred_check
          %p135 = pneg %p94
        $region14: #{tpu_custom_call.1} parent=11 // pred_check_branch
          %137 = sbr.rel (%p135) target = $region16
        $region15: #{tpu_custom_call.1} parent=11 // pred_region
          _
        $region16: #{tpu_custom_call.1} parent=11 // pred_fallthru
          _
      $region12: #{tpu_custom_call.1} parent=5 // pred_fallthru
        _
      %p138 = scmp.lt.s32.totalorder %s19, 2
      // Predicated region
      $region17: #{tpu_custom_call.1} parent=5 // pred_check
        %p139 = pneg %p138
      $region18: #{tpu_custom_call.1} parent=5 // pred_check_branch
        %141 = sbr.rel (%p139) target = $region20
      $region19: #{tpu_custom_call.1} parent=5 // pred_region
        // Predicated region
        $region21: #{tpu_custom_call.1} parent=19 // pred_check
          %p142 = pneg %p39
        $region22: #{tpu_custom_call.1} parent=19 // pred_check_branch
          %144 = sbr.rel (%p142) target = $region24
        $region23: #{tpu_custom_call.1} parent=19 // pred_region
          %p145 = scmp.lt.s32.totalorder %s19, 1
          %s146 = scalar_select %p145, %s19, 1
          %s147 = smul.addr %s146, 12
          %s148 = smul.addr %s147, 8
          %s149 = scalar_lea.vmem %s1, %s148
        $region24: #{tpu_custom_call.1} parent=19 // pred_fallthru
          _
        // Predicated region
        $region25: #{tpu_custom_call.1} parent=19 // pred_check
          %p150 = pneg %p67
        $region26: #{tpu_custom_call.1} parent=19 // pred_check_branch
          %152 = sbr.rel (%p150) target = $region28
        $region27: #{tpu_custom_call.1} parent=19 // pred_region
          %s153 = sld [smem:[#allocation3 + %s19]]
          %p154 = scmp.lt.s32.totalorder %s153, 1
          %s155 = scalar_select %p154, %s153, 1
          %s156 = smul.addr %s155, 8
          %s157 = scalar_lea.vmem %s2, %s156
          %s158 = sld [smem:[#allocation3 + %s19]]
        $region28: #{tpu_custom_call.1} parent=19 // pred_fallthru
          _
      $region20: #{tpu_custom_call.1} parent=5 // pred_fallthru
        _
      %p159 = scmp.le.s32.totalorder 1, %s19
      %p160 = scmp.lt.s32.totalorder %s19, 3
      %p161 = pnand %p159, %p160
      %p162 = pneg %p161
      // Predicated region
      $region29: #{tpu_custom_call.1} parent=5 // pred_check
        _
      $region30: #{tpu_custom_call.1} parent=5 // pred_check_branch
        %164 = sbr.rel (%p161) target = $region32
      $region31: #{tpu_custom_call.1} parent=5 // pred_region
        %s165 = ssub.s32 %s19, 1
        %p166 = scmp.lt.s32.totalorder %s24, 1
        %s167 = scalar_select %p166, %s24, 1
        %s168 = smul.addr %s167, 12
        %s169 = smul.addr %s168, 8
        %s170 = scalar_lea.vmem %s1, %s169
        %p171 = pneg %p45
        %p172 = pneg %p42
        %s173 = sld [smem:[#allocation3 + %s24]]
        %p174 = scmp.lt.s32.totalorder %s173, 1
        %s175 = scalar_select %p174, %s173, 1
        %s176 = smul.addr %s175, 8
        %s177 = scalar_lea.vmem %s2, %s176
        %p178 = pneg %p73
        %p179 = pneg %p70
        %p180 = pneg %p94
        %p181 = pneg %p91
        %p182 = pneg %p120
        %p183 = pneg %p117
        %s184 = sand.u32 %s107, 1
        %s185 = scalar_lea.sflag [#allocation5], %s184
        %s186 = sand.u32 %s107, 1
        %s187 = smul.addr %s186, 16
        %s188 = scalar_lea.vmem [#allocation4], %s187
        %p189 = scmp.lt.s32.totalorder %s24, 1
        %s190 = scalar_select %p189, %s24, 1
        %s191 = smul.addr %s190, 12
        %s192 = smul.addr %s191, 8
        %s193 = scalar_lea.vmem %s1, %s192
        %s194 = sld [smem:[#allocation3 + %s24]]
        %p195 = scmp.lt.s32.totalorder %s194, 1
        %s196 = scalar_select %p195, %s194, 1
        %s197 = smul.addr %s196, 8
        %s198 = scalar_lea.vmem %s2, %s197
        %s199 = sld [smem:[#allocation3 + %s24]]
        %v200 = vld [vmem:[%s198] sm:$0xff]
        %v201 = vld [vmem:[%s3] sm:$0xff]
        %v202 = vld [vmem:[%s193] sm:$0xff]
        %v203 = vld [vmem:[%s193 + $0x8] sm:$0xff]
        %v204 = vld [vmem:[%s193 + $0x10] sm:$0x3]
        %v205 = vld [vmem:[%s193 + $0x18] sm:$0xff]
        %v206 = vld [vmem:[%s193 + $0x20] sm:$0xff]
        %v207 = vld [vmem:[%s193 + $0x28] sm:$0x3]
        %v208 = vld [vmem:[%s193 + $0x30] sm:$0xff]
        %v209 = vld [vmem:[%s193 + $0x38] sm:$0xff]
        %v210 = vld [vmem:[%s193 + $0x40] sm:$0x3]
        %v211 = vld [vmem:[%s193 + $0x48] sm:$0xff]
        %v212 = vld [vmem:[%s193 + $0x50] sm:$0xff]
        %v213 = vld [vmem:[%s193 + $0x58] sm:$0x3]
        %v214 = vcombine.low %v202, %v208
        %v215 = vcombine.high %v202, %v208
        %v217 = vunpack.c.l.s4 1983009808
        %v218 = vunpack.c.0.s8 %v217
        %v219 = vlaneseq
        %v220 = vshrl.u32 %v219, 7
        %v221 = vsub.s32 %v218, %v220
        %v222 = vrot.slane %v214, %v221
        %v224 = vunpack.c.l.s4 1983009808
        %v225 = vunpack.c.0.s8 %v224
        %v226 = vlaneseq
        %v227 = vshrl.u32 %v226, 7
        %v228 = vsub.s32 %v225, %v227
        %v229 = vrot.slane %v215, %v228
        %v230 = vcombine.low %v205, %v211
        %v231 = vcombine.high %v205, %v211
        %v233 = vunpack.c.l.s4 1983009808
        %v234 = vunpack.c.0.s8 %v233
        %v235 = vlaneseq
        %v236 = vshrl.u32 %v235, 7
        %v237 = vsub.s32 %v234, %v236
        %v238 = vrot.slane %v230, %v237
        %v240 = vunpack.c.l.s4 1983009808
        %v241 = vunpack.c.0.s8 %v240
        %v242 = vlaneseq
        %v243 = vshrl.u32 %v242, 7
        %v244 = vsub.s32 %v241, %v243
        %v245 = vrot.slane %v231, %v244
        %v246 = vcombine.low %v222, %v238
        %v247 = vcombine.high %v222, %v238
        %v249 = vunpack.c.l.s4 1934713408
        %v250 = vunpack.c.0.s8 %v249
        %v251 = vlaneseq
        %v252 = vshrl.u32 %v251, 7
        %v253 = vsub.s32 %v250, %v252
        %v254 = vrot.slane %v246, %v253
        %v256 = vunpack.c.l.s4 1934713408
        %v257 = vunpack.c.0.s8 %v256
        %v258 = vlaneseq
        %v259 = vshrl.u32 %v258, 7
        %v260 = vsub.s32 %v257, %v259
        %v261 = vrot.slane %v247, %v260
        %v262 = vcombine.low %v229, %v245
        %v263 = vcombine.high %v229, %v245
        %v265 = vunpack.c.l.s4 1934713408
        %v266 = vunpack.c.0.s8 %v265
        %v267 = vlaneseq
        %v268 = vshrl.u32 %v267, 7
        %v269 = vsub.s32 %v266, %v268
        %v270 = vrot.slane %v262, %v269
        %v272 = vunpack.c.l.s4 1934713408
        %v273 = vunpack.c.0.s8 %v272
        %v274 = vlaneseq
        %v275 = vshrl.u32 %v274, 7
        %v276 = vsub.s32 %v273, %v275
        %v277 = vrot.slane %v263, %v276
        %v278 = vcombine.high %v254, 0.0
        %v279 = vcombine.high %v261, 0.0
        %v280 = vcombine.high %v270, 0.0
        %v281 = vcombine.high %v277, 0.0
        %v282 = vcombine.low %v203, %v209
        %v283 = vcombine.high %v203, %v209
        %v285 = vunpack.c.l.s4 1983009808
        %v286 = vunpack.c.0.s8 %v285
        %v287 = vlaneseq
        %v288 = vshrl.u32 %v287, 7
        %v289 = vsub.s32 %v286, %v288
        %v290 = vrot.slane %v282, %v289
        %v292 = vunpack.c.l.s4 1983009808
        %v293 = vunpack.c.0.s8 %v292
        %v294 = vlaneseq
        %v295 = vshrl.u32 %v294, 7
        %v296 = vsub.s32 %v293, %v295
        %v297 = vrot.slane %v283, %v296
        %v298 = vcombine.low %v206, %v212
        %v299 = vcombine.high %v206, %v212
        %v301 = vunpack.c.l.s4 1983009808
        %v302 = vunpack.c.0.s8 %v301
        %v303 = vlaneseq
        %v304 = vshrl.u32 %v303, 7
        %v305 = vsub.s32 %v302, %v304
        %v306 = vrot.slane %v298, %v305
        %v308 = vunpack.c.l.s4 1983009808
        %v309 = vunpack.c.0.s8 %v308
        %v310 = vlaneseq
        %v311 = vshrl.u32 %v310, 7
        %v312 = vsub.s32 %v309, %v311
        %v313 = vrot.slane %v299, %v312
        %v314 = vcombine.low %v290, %v306
        %v315 = vcombine.high %v290, %v306
        %v317 = vunpack.c.l.s4 1934713408
        %v318 = vunpack.c.0.s8 %v317
        %v319 = vlaneseq
        %v320 = vshrl.u32 %v319, 7
        %v321 = vsub.s32 %v318, %v320
        %v322 = vrot.slane %v314, %v321
        %v324 = vunpack.c.l.s4 1934713408
        %v325 = vunpack.c.0.s8 %v324
        %v326 = vlaneseq
        %v327 = vshrl.u32 %v326, 7
        %v328 = vsub.s32 %v325, %v327
        %v329 = vrot.slane %v315, %v328
        %v330 = vcombine.low %v297, %v313
        %v331 = vcombine.high %v297, %v313
        %v333 = vunpack.c.l.s4 1934713408
        %v334 = vunpack.c.0.s8 %v333
        %v335 = vlaneseq
        %v336 = vshrl.u32 %v335, 7
        %v337 = vsub.s32 %v334, %v336
        %v338 = vrot.slane %v330, %v337
        %v340 = vunpack.c.l.s4 1934713408
        %v341 = vunpack.c.0.s8 %v340
        %v342 = vlaneseq
        %v343 = vshrl.u32 %v342, 7
        %v344 = vsub.s32 %v341, %v343
        %v345 = vrot.slane %v331, %v344
        %v346 = vcombine.high %v322, 0.0
        %v347 = vcombine.high %v329, 0.0
        %v348 = vcombine.high %v338, 0.0
        %v349 = vcombine.high %v345, 0.0
        %351 = vrot.lane.b32.xlu0 %v278, 16
        %v352 = vpop.permute.xlu0 %351
        %355 = vrot.lane.b32.xlu0 %v261, 32
        %v356 = vpop.permute.xlu0 %355
        %359 = vrot.lane.b32.xlu0 %v279, 48
        %v360 = vpop.permute.xlu0 %359
        %363 = vrot.lane.b32.xlu0 %v270, 64
        %v364 = vpop.permute.xlu0 %363
        %367 = vrot.lane.b32.xlu0 %v280, 80
        %v368 = vpop.permute.xlu0 %367
        %371 = vrot.lane.b32.xlu0 %v277, 96
        %v372 = vpop.permute.xlu0 %371
        %375 = vrot.lane.b32.xlu0 %v281, 112
        %v376 = vpop.permute.xlu0 %375
        %379 = vrot.lane.b32.xlu0 %v346, 16
        %v380 = vpop.permute.xlu0 %379
        %383 = vrot.lane.b32.xlu0 %v329, 32
        %v384 = vpop.permute.xlu0 %383
        %387 = vrot.lane.b32.xlu0 %v347, 48
        %v388 = vpop.permute.xlu0 %387
        %391 = vrot.lane.b32.xlu0 %v338, 64
        %v392 = vpop.permute.xlu0 %391
        %395 = vrot.lane.b32.xlu0 %v348, 80
        %v396 = vpop.permute.xlu0 %395
        %399 = vrot.lane.b32.xlu0 %v345, 96
        %v400 = vpop.permute.xlu0 %399
        %403 = vrot.lane.b32.xlu0 %v349, 112
        %v404 = vpop.permute.xlu0 %403
        %vm406 = vcmask 130048
        %v407 = vsel %vm406, %v254, %v352
        %vm408 = vcmask 261120
        %v409 = vsel %vm408, %v407, %v356
        %vm410 = vcmask 392192
        %v411 = vsel %vm410, %v409, %v360
        %vm412 = vcmask 523264
        %v413 = vsel %vm412, %v411, %v364
        %vm414 = vcmask 654336
        %v415 = vsel %vm414, %v413, %v368
        %vm416 = vcmask 785408
        %v417 = vsel %vm416, %v415, %v372
        %vm418 = vcmask 916480
        %v419 = vsel %vm418, %v417, %v376
        %v420 = vsel %vm406, %v322, %v380
        %v421 = vsel %vm408, %v420, %v384
        %v422 = vsel %vm410, %v421, %v388
        %v423 = vsel %vm412, %v422, %v392
        %v424 = vsel %vm414, %v423, %v396
        %v425 = vsel %vm416, %v424, %v400
        %v426 = vsel %vm418, %v425, %v404
        %435 = vrot.lane.b32.xlu0 %v202, 127
        %v436 = vpop.permute.xlu0 %435
        %437 = vrot.lane.b32.xlu0 %v203, 127
        %v438 = vpop.permute.xlu0 %437
        %439 = vrot.lane.b32.xlu0 %v205, 127
        %v440 = vpop.permute.xlu0 %439
        %441 = vrot.lane.b32.xlu0 %v206, 127
        %v442 = vpop.permute.xlu0 %441
        %443 = vrot.lane.b32.xlu0 %v208, 127
        %v444 = vpop.permute.xlu0 %443
        %445 = vrot.lane.b32.xlu0 %v209, 127
        %v446 = vpop.permute.xlu0 %445
        %447 = vrot.lane.b32.xlu0 %v211, 127
        %v448 = vpop.permute.xlu0 %447
        %449 = vrot.lane.b32.xlu0 %v212, 127
        %v450 = vpop.permute.xlu0 %449
        %v459 = vcombine.low %v436, %v444
        %v460 = vcombine.high %v436, %v444
        %v462 = vunpack.c.l.s4 1983009808
        %v463 = vunpack.c.0.s8 %v462
        %v464 = vlaneseq
        %v465 = vshrl.u32 %v464, 7
        %v466 = vsub.s32 %v463, %v465
        %v467 = vrot.slane %v459, %v466
        %v469 = vunpack.c.l.s4 1983009808
        %v470 = vunpack.c.0.s8 %v469
        %v471 = vlaneseq
        %v472 = vshrl.u32 %v471, 7
        %v473 = vsub.s32 %v470, %v472
        %v474 = vrot.slane %v460, %v473
        %v475 = vcombine.low %v440, %v448
        %v476 = vcombine.high %v440, %v448
        %v478 = vunpack.c.l.s4 1983009808
        %v479 = vunpack.c.0.s8 %v478
        %v480 = vlaneseq
        %v481 = vshrl.u32 %v480, 7
        %v482 = vsub.s32 %v479, %v481
        %v483 = vrot.slane %v475, %v482
        %v485 = vunpack.c.l.s4 1983009808
        %v486 = vunpack.c.0.s8 %v485
        %v487 = vlaneseq
        %v488 = vshrl.u32 %v487, 7
        %v489 = vsub.s32 %v486, %v488
        %v490 = vrot.slane %v476, %v489
        %v491 = vcombine.low %v467, %v483
        %v492 = vcombine.high %v467, %v483
        %v494 = vunpack.c.l.s4 1934713408
        %v495 = vunpack.c.0.s8 %v494
        %v496 = vlaneseq
        %v497 = vshrl.u32 %v496, 7
        %v498 = vsub.s32 %v495, %v497
        %v499 = vrot.slane %v491, %v498
        %v501 = vunpack.c.l.s4 1934713408
        %v502 = vunpack.c.0.s8 %v501
        %v503 = vlaneseq
        %v504 = vshrl.u32 %v503, 7
        %v505 = vsub.s32 %v502, %v504
        %v506 = vrot.slane %v492, %v505
        %v507 = vcombine.low %v474, %v490
        %v508 = vcombine.high %v474, %v490
        %v510 = vunpack.c.l.s4 1934713408
        %v511 = vunpack.c.0.s8 %v510
        %v512 = vlaneseq
        %v513 = vshrl.u32 %v512, 7
        %v514 = vsub.s32 %v511, %v513
        %v515 = vrot.slane %v507, %v514
        %v517 = vunpack.c.l.s4 1934713408
        %v518 = vunpack.c.0.s8 %v517
        %v519 = vlaneseq
        %v520 = vshrl.u32 %v519, 7
        %v521 = vsub.s32 %v518, %v520
        %v522 = vrot.slane %v508, %v521
        %v523 = vcombine.high %v499, 0.0
        %v524 = vcombine.high %v506, 0.0
        %v525 = vcombine.high %v515, 0.0
        %v526 = vcombine.high %v522, 0.0
        %v527 = vcombine.low %v438, %v446
        %v528 = vcombine.high %v438, %v446
        %v530 = vunpack.c.l.s4 1983009808
        %v531 = vunpack.c.0.s8 %v530
        %v532 = vlaneseq
        %v533 = vshrl.u32 %v532, 7
        %v534 = vsub.s32 %v531, %v533
        %v535 = vrot.slane %v527, %v534
        %v537 = vunpack.c.l.s4 1983009808
        %v538 = vunpack.c.0.s8 %v537
        %v539 = vlaneseq
        %v540 = vshrl.u32 %v539, 7
        %v541 = vsub.s32 %v538, %v540
        %v542 = vrot.slane %v528, %v541
        %v543 = vcombine.low %v442, %v450
        %v544 = vcombine.high %v442, %v450
        %v546 = vunpack.c.l.s4 1983009808
        %v547 = vunpack.c.0.s8 %v546
        %v548 = vlaneseq
        %v549 = vshrl.u32 %v548, 7
        %v550 = vsub.s32 %v547, %v549
        %v551 = vrot.slane %v543, %v550
        %v553 = vunpack.c.l.s4 1983009808
        %v554 = vunpack.c.0.s8 %v553
        %v555 = vlaneseq
        %v556 = vshrl.u32 %v555, 7
        %v557 = vsub.s32 %v554, %v556
        %v558 = vrot.slane %v544, %v557
        %v559 = vcombine.low %v535, %v551
        %v560 = vcombine.high %v535, %v551
        %v562 = vunpack.c.l.s4 1934713408
        %v563 = vunpack.c.0.s8 %v562
        %v564 = vlaneseq
        %v565 = vshrl.u32 %v564, 7
        %v566 = vsub.s32 %v563, %v565
        %v567 = vrot.slane %v559, %v566
        %v569 = vunpack.c.l.s4 1934713408
        %v570 = vunpack.c.0.s8 %v569
        %v571 = vlaneseq
        %v572 = vshrl.u32 %v571, 7
        %v573 = vsub.s32 %v570, %v572
        %v574 = vrot.slane %v560, %v573
        %v575 = vcombine.low %v542, %v558
        %v576 = vcombine.high %v542, %v558
        %v578 = vunpack.c.l.s4 1934713408
        %v579 = vunpack.c.0.s8 %v578
        %v580 = vlaneseq
        %v581 = vshrl.u32 %v580, 7
        %v582 = vsub.s32 %v579, %v581
        %v583 = vrot.slane %v575, %v582
        %v585 = vunpack.c.l.s4 1934713408
        %v586 = vunpack.c.0.s8 %v585
        %v587 = vlaneseq
        %v588 = vshrl.u32 %v587, 7
        %v589 = vsub.s32 %v586, %v588
        %v590 = vrot.slane %v576, %v589
        %v591 = vcombine.high %v567, 0.0
        %v592 = vcombine.high %v574, 0.0
        %v593 = vcombine.high %v583, 0.0
        %v594 = vcombine.high %v590, 0.0
        %596 = vrot.lane.b32.xlu0 %v523, 16
        %v597 = vpop.permute.xlu0 %596
        %600 = vrot.lane.b32.xlu0 %v506, 32
        %v601 = vpop.permute.xlu0 %600
        %604 = vrot.lane.b32.xlu0 %v524, 48
        %v605 = vpop.permute.xlu0 %604
        %608 = vrot.lane.b32.xlu0 %v515, 64
        %v609 = vpop.permute.xlu0 %608
        %612 = vrot.lane.b32.xlu0 %v525, 80
        %v613 = vpop.permute.xlu0 %612
        %616 = vrot.lane.b32.xlu0 %v522, 96
        %v617 = vpop.permute.xlu0 %616
        %620 = vrot.lane.b32.xlu0 %v526, 112
        %v621 = vpop.permute.xlu0 %620
        %624 = vrot.lane.b32.xlu0 %v591, 16
        %v625 = vpop.permute.xlu0 %624
        %628 = vrot.lane.b32.xlu0 %v574, 32
        %v629 = vpop.permute.xlu0 %628
        %632 = vrot.lane.b32.xlu0 %v592, 48
        %v633 = vpop.permute.xlu0 %632
        %636 = vrot.lane.b32.xlu0 %v583, 64
        %v637 = vpop.permute.xlu0 %636
        %640 = vrot.lane.b32.xlu0 %v593, 80
        %v641 = vpop.permute.xlu0 %640
        %644 = vrot.lane.b32.xlu0 %v590, 96
        %v645 = vpop.permute.xlu0 %644
        %648 = vrot.lane.b32.xlu0 %v594, 112
        %v649 = vpop.permute.xlu0 %648
        %v651 = vsel %vm406, %v499, %v597
        %v652 = vsel %vm408, %v651, %v601
        %v653 = vsel %vm410, %v652, %v605
        %v654 = vsel %vm412, %v653, %v609
        %v655 = vsel %vm414, %v654, %v613
        %v656 = vsel %vm416, %v655, %v617
        %v657 = vsel %vm418, %v656, %v621
        %v658 = vsel %vm406, %v567, %v625
        %v659 = vsel %vm408, %v658, %v629
        %v660 = vsel %vm410, %v659, %v633
        %v661 = vsel %vm412, %v660, %v637
        %v662 = vsel %vm414, %v661, %v641
        %v663 = vsel %vm416, %v662, %v645
        %v664 = vsel %vm418, %v663, %v649
        %665 = vrot.lane.b32.xlu0 %v202, 126
        %v666 = vpop.permute.xlu0 %665
        %667 = vrot.lane.b32.xlu0 %v203, 126
        %v668 = vpop.permute.xlu0 %667
        %669 = vrot.lane.b32.xlu0 %v205, 126
        %v670 = vpop.permute.xlu0 %669
        %671 = vrot.lane.b32.xlu0 %v206, 126
        %v672 = vpop.permute.xlu0 %671
        %673 = vrot.lane.b32.xlu0 %v208, 126
        %v674 = vpop.permute.xlu0 %673
        %675 = vrot.lane.b32.xlu0 %v209, 126
        %v676 = vpop.permute.xlu0 %675
        %677 = vrot.lane.b32.xlu0 %v211, 126
        %v678 = vpop.permute.xlu0 %677
        %679 = vrot.lane.b32.xlu0 %v212, 126
        %v680 = vpop.permute.xlu0 %679
        %v689 = vcombine.low %v666, %v674
        %v690 = vcombine.high %v666, %v674
        %v692 = vunpack.c.l.s4 1983009808
        %v693 = vunpack.c.0.s8 %v692
        %v694 = vlaneseq
        %v695 = vshrl.u32 %v694, 7
        %v696 = vsub.s32 %v693, %v695
        %v697 = vrot.slane %v689, %v696
        %v699 = vunpack.c.l.s4 1983009808
        %v700 = vunpack.c.0.s8 %v699
        %v701 = vlaneseq
        %v702 = vshrl.u32 %v701, 7
        %v703 = vsub.s32 %v700, %v702
        %v704 = vrot.slane %v690, %v703
        %v705 = vcombine.low %v670, %v678
        %v706 = vcombine.high %v670, %v678
        %v708 = vunpack.c.l.s4 1983009808
        %v709 = vunpack.c.0.s8 %v708
        %v710 = vlaneseq
        %v711 = vshrl.u32 %v710, 7
        %v712 = vsub.s32 %v709, %v711
        %v713 = vrot.slane %v705, %v712
        %v715 = vunpack.c.l.s4 1983009808
        %v716 = vunpack.c.0.s8 %v715
        %v717 = vlaneseq
        %v718 = vshrl.u32 %v717, 7
        %v719 = vsub.s32 %v716, %v718
        %v720 = vrot.slane %v706, %v719
        %v721 = vcombine.low %v697, %v713
        %v722 = vcombine.high %v697, %v713
        %v724 = vunpack.c.l.s4 1934713408
        %v725 = vunpack.c.0.s8 %v724
        %v726 = vlaneseq
        %v727 = vshrl.u32 %v726, 7
        %v728 = vsub.s32 %v725, %v727
        %v729 = vrot.slane %v721, %v728
        %v731 = vunpack.c.l.s4 1934713408
        %v732 = vunpack.c.0.s8 %v731
        %v733 = vlaneseq
        %v734 = vshrl.u32 %v733, 7
        %v735 = vsub.s32 %v732, %v734
        %v736 = vrot.slane %v722, %v735
        %v737 = vcombine.low %v704, %v720
        %v738 = vcombine.high %v704, %v720
        %v740 = vunpack.c.l.s4 1934713408
        %v741 = vunpack.c.0.s8 %v740
        %v742 = vlaneseq
        %v743 = vshrl.u32 %v742, 7
        %v744 = vsub.s32 %v741, %v743
        %v745 = vrot.slane %v737, %v744
        %v747 = vunpack.c.l.s4 1934713408
        %v748 = vunpack.c.0.s8 %v747
        %v749 = vlaneseq
        %v750 = vshrl.u32 %v749, 7
        %v751 = vsub.s32 %v748, %v750
        %v752 = vrot.slane %v738, %v751
        %v753 = vcombine.high %v729, 0.0
        %v754 = vcombine.high %v736, 0.0
        %v755 = vcombine.high %v745, 0.0
        %v756 = vcombine.high %v752, 0.0
        %v757 = vcombine.low %v668, %v676
        %v758 = vcombine.high %v668, %v676
        %v760 = vunpack.c.l.s4 1983009808
        %v761 = vunpack.c.0.s8 %v760
        %v762 = vlaneseq
        %v763 = vshrl.u32 %v762, 7
        %v764 = vsub.s32 %v761, %v763
        %v765 = vrot.slane %v757, %v764
        %v767 = vunpack.c.l.s4 1983009808
        %v768 = vunpack.c.0.s8 %v767
        %v769 = vlaneseq
        %v770 = vshrl.u32 %v769, 7
        %v771 = vsub.s32 %v768, %v770
        %v772 = vrot.slane %v758, %v771
        %v773 = vcombine.low %v672, %v680
        %v774 = vcombine.high %v672, %v680
        %v776 = vunpack.c.l.s4 1983009808
        %v777 = vunpack.c.0.s8 %v776
        %v778 = vlaneseq
        %v779 = vshrl.u32 %v778, 7
        %v780 = vsub.s32 %v777, %v779
        %v781 = vrot.slane %v773, %v780
        %v783 = vunpack.c.l.s4 1983009808
        %v784 = vunpack.c.0.s8 %v783
        %v785 = vlaneseq
        %v786 = vshrl.u32 %v785, 7
        %v787 = vsub.s32 %v784, %v786
        %v788 = vrot.slane %v774, %v787
        %v789 = vcombine.low %v765, %v781
        %v790 = vcombine.high %v765, %v781
        %v792 = vunpack.c.l.s4 1934713408
        %v793 = vunpack.c.0.s8 %v792
        %v794 = vlaneseq
        %v795 = vshrl.u32 %v794, 7
        %v796 = vsub.s32 %v793, %v795
        %v797 = vrot.slane %v789, %v796
        %v799 = vunpack.c.l.s4 1934713408
        %v800 = vunpack.c.0.s8 %v799
        %v801 = vlaneseq
        %v802 = vshrl.u32 %v801, 7
        %v803 = vsub.s32 %v800, %v802
        %v804 = vrot.slane %v790, %v803
        %v805 = vcombine.low %v772, %v788
        %v806 = vcombine.high %v772, %v788
        %v808 = vunpack.c.l.s4 1934713408
        %v809 = vunpack.c.0.s8 %v808
        %v810 = vlaneseq
        %v811 = vshrl.u32 %v810, 7
        %v812 = vsub.s32 %v809, %v811
        %v813 = vrot.slane %v805, %v812
        %v815 = vunpack.c.l.s4 1934713408
        %v816 = vunpack.c.0.s8 %v815
        %v817 = vlaneseq
        %v818 = vshrl.u32 %v817, 7
        %v819 = vsub.s32 %v816, %v818
        %v820 = vrot.slane %v806, %v819
        %v821 = vcombine.high %v797, 0.0
        %v822 = vcombine.high %v804, 0.0
        %v823 = vcombine.high %v813, 0.0
        %v824 = vcombine.high %v820, 0.0
        %826 = vrot.lane.b32.xlu0 %v753, 16
        %v827 = vpop.permute.xlu0 %826
        %830 = vrot.lane.b32.xlu0 %v736, 32
        %v831 = vpop.permute.xlu0 %830
        %834 = vrot.lane.b32.xlu0 %v754, 48
        %v835 = vpop.permute.xlu0 %834
        %838 = vrot.lane.b32.xlu0 %v745, 64
        %v839 = vpop.permute.xlu0 %838
        %842 = vrot.lane.b32.xlu0 %v755, 80
        %v843 = vpop.permute.xlu0 %842
        %846 = vrot.lane.b32.xlu0 %v752, 96
        %v847 = vpop.permute.xlu0 %846
        %850 = vrot.lane.b32.xlu0 %v756, 112
        %v851 = vpop.permute.xlu0 %850
        %854 = vrot.lane.b32.xlu0 %v821, 16
        %v855 = vpop.permute.xlu0 %854
        %858 = vrot.lane.b32.xlu0 %v804, 32
        %v859 = vpop.permute.xlu0 %858
        %862 = vrot.lane.b32.xlu0 %v822, 48
        %v863 = vpop.permute.xlu0 %862
        %866 = vrot.lane.b32.xlu0 %v813, 64
        %v867 = vpop.permute.xlu0 %866
        %870 = vrot.lane.b32.xlu0 %v823, 80
        %v871 = vpop.permute.xlu0 %870
        %874 = vrot.lane.b32.xlu0 %v820, 96
        %v875 = vpop.permute.xlu0 %874
        %878 = vrot.lane.b32.xlu0 %v824, 112
        %v879 = vpop.permute.xlu0 %878
        %v881 = vsel %vm406, %v729, %v827
        %v882 = vsel %vm408, %v881, %v831
        %v883 = vsel %vm410, %v882, %v835
        %v884 = vsel %vm412, %v883, %v839
        %v885 = vsel %vm414, %v884, %v843
        %v886 = vsel %vm416, %v885, %v847
        %v887 = vsel %vm418, %v886, %v851
        %v888 = vsel %vm406, %v797, %v855
        %v889 = vsel %vm408, %v888, %v859
        %v890 = vsel %vm410, %v889, %v863
        %v891 = vsel %vm412, %v890, %v867
        %v892 = vsel %vm414, %v891, %v871
        %v893 = vsel %vm416, %v892, %v875
        %v894 = vsel %vm418, %v893, %v879
        %vm899 = vcmask 1046528
        %v900 = vrot.slane %v202, 1
        %v901 = vrot.slane %v203, 1
        %v902 = vsel %vm899, %v900, %v901
        %v903 = vrot.slane %v204, 1
        %v904 = vsel %vm899, %v901, %v903
        %v905 = vrot.slane %v205, 1
        %v906 = vrot.slane %v206, 1
        %v907 = vsel %vm899, %v905, %v906
        %v908 = vrot.slane %v207, 1
        %v909 = vsel %vm899, %v906, %v908
        %v910 = vrot.slane %v208, 1
        %v911 = vrot.slane %v209, 1
        %v912 = vsel %vm899, %v910, %v911
        %v913 = vrot.slane %v210, 1
        %v914 = vsel %vm899, %v911, %v913
        %v915 = vrot.slane %v211, 1
        %v916 = vrot.slane %v212, 1
        %v917 = vsel %vm899, %v915, %v916
        %v918 = vrot.slane %v213, 1
        %v919 = vsel %vm899, %v916, %v918
        %v928 = vcombine.low %v902, %v912
        %v929 = vcombine.high %v902, %v912
        %v931 = vunpack.c.l.s4 1983009808
        %v932 = vunpack.c.0.s8 %v931
        %v933 = vlaneseq
        %v934 = vshrl.u32 %v933, 7
        %v935 = vsub.s32 %v932, %v934
        %v936 = vrot.slane %v928, %v935
        %v938 = vunpack.c.l.s4 1983009808
        %v939 = vunpack.c.0.s8 %v938
        %v940 = vlaneseq
        %v941 = vshrl.u32 %v940, 7
        %v942 = vsub.s32 %v939, %v941
        %v943 = vrot.slane %v929, %v942
        %v944 = vcombine.low %v907, %v917
        %v945 = vcombine.high %v907, %v917
        %v947 = vunpack.c.l.s4 1983009808
        %v948 = vunpack.c.0.s8 %v947
        %v949 = vlaneseq
        %v950 = vshrl.u32 %v949, 7
        %v951 = vsub.s32 %v948, %v950
        %v952 = vrot.slane %v944, %v951
        %v954 = vunpack.c.l.s4 1983009808
        %v955 = vunpack.c.0.s8 %v954
        %v956 = vlaneseq
        %v957 = vshrl.u32 %v956, 7
        %v958 = vsub.s32 %v955, %v957
        %v959 = vrot.slane %v945, %v958
        %v960 = vcombine.low %v936, %v952
        %v961 = vcombine.high %v936, %v952
        %v963 = vunpack.c.l.s4 1934713408
        %v964 = vunpack.c.0.s8 %v963
        %v965 = vlaneseq
        %v966 = vshrl.u32 %v965, 7
        %v967 = vsub.s32 %v964, %v966
        %v968 = vrot.slane %v960, %v967
        %v970 = vunpack.c.l.s4 1934713408
        %v971 = vunpack.c.0.s8 %v970
        %v972 = vlaneseq
        %v973 = vshrl.u32 %v972, 7
        %v974 = vsub.s32 %v971, %v973
        %v975 = vrot.slane %v961, %v974
        %v976 = vcombine.low %v943, %v959
        %v977 = vcombine.high %v943, %v959
        %v979 = vunpack.c.l.s4 1934713408
        %v980 = vunpack.c.0.s8 %v979
        %v981 = vlaneseq
        %v982 = vshrl.u32 %v981, 7
        %v983 = vsub.s32 %v980, %v982
        %v984 = vrot.slane %v976, %v983
        %v986 = vunpack.c.l.s4 1934713408
        %v987 = vunpack.c.0.s8 %v986
        %v988 = vlaneseq
        %v989 = vshrl.u32 %v988, 7
        %v990 = vsub.s32 %v987, %v989
        %v991 = vrot.slane %v977, %v990
        %v992 = vcombine.high %v968, 0.0
        %v993 = vcombine.high %v975, 0.0
        %v994 = vcombine.high %v984, 0.0
        %v995 = vcombine.high %v991, 0.0
        %v996 = vcombine.low %v904, %v914
        %v997 = vcombine.high %v904, %v914
        %v999 = vunpack.c.l.s4 1983009808
        %v1000 = vunpack.c.0.s8 %v999
        %v1001 = vlaneseq
        %v1002 = vshrl.u32 %v1001, 7
        %v1003 = vsub.s32 %v1000, %v1002
        %v1004 = vrot.slane %v996, %v1003
        %v1006 = vunpack.c.l.s4 1983009808
        %v1007 = vunpack.c.0.s8 %v1006
        %v1008 = vlaneseq
        %v1009 = vshrl.u32 %v1008, 7
        %v1010 = vsub.s32 %v1007, %v1009
        %v1011 = vrot.slane %v997, %v1010
        %v1012 = vcombine.low %v909, %v919
        %v1013 = vcombine.high %v909, %v919
        %v1015 = vunpack.c.l.s4 1983009808
        %v1016 = vunpack.c.0.s8 %v1015
        %v1017 = vlaneseq
        %v1018 = vshrl.u32 %v1017, 7
        %v1019 = vsub.s32 %v1016, %v1018
        %v1020 = vrot.slane %v1012, %v1019
        %v1022 = vunpack.c.l.s4 1983009808
        %v1023 = vunpack.c.0.s8 %v1022
        %v1024 = vlaneseq
        %v1025 = vshrl.u32 %v1024, 7
        %v1026 = vsub.s32 %v1023, %v1025
        %v1027 = vrot.slane %v1013, %v1026
        %v1028 = vcombine.low %v1004, %v1020
        %v1029 = vcombine.high %v1004, %v1020
        %v1031 = vunpack.c.l.s4 1934713408
        %v1032 = vunpack.c.0.s8 %v1031
        %v1033 = vlaneseq
        %v1034 = vshrl.u32 %v1033, 7
        %v1035 = vsub.s32 %v1032, %v1034
        %v1036 = vrot.slane %v1028, %v1035
        %v1038 = vunpack.c.l.s4 1934713408
        %v1039 = vunpack.c.0.s8 %v1038
        %v1040 = vlaneseq
        %v1041 = vshrl.u32 %v1040, 7
        %v1042 = vsub.s32 %v1039, %v1041
        %v1043 = vrot.slane %v1029, %v1042
        %v1044 = vcombine.low %v1011, %v1027
        %v1045 = vcombine.high %v1011, %v1027
        %v1047 = vunpack.c.l.s4 1934713408
        %v1048 = vunpack.c.0.s8 %v1047
        %v1049 = vlaneseq
        %v1050 = vshrl.u32 %v1049, 7
        %v1051 = vsub.s32 %v1048, %v1050
        %v1052 = vrot.slane %v1044, %v1051
        %v1054 = vunpack.c.l.s4 1934713408
        %v1055 = vunpack.c.0.s8 %v1054
        %v1056 = vlaneseq
        %v1057 = vshrl.u32 %v1056, 7
        %v1058 = vsub.s32 %v1055, %v1057
        %v1059 = vrot.slane %v1045, %v1058
        %v1060 = vcombine.high %v1036, 0.0
        %v1061 = vcombine.high %v1043, 0.0
        %v1062 = vcombine.high %v1052, 0.0
        %v1063 = vcombine.high %v1059, 0.0
        %1065 = vrot.lane.b32.xlu0 %v992, 16
        %v1066 = vpop.permute.xlu0 %1065
        %1069 = vrot.lane.b32.xlu0 %v975, 32
        %v1070 = vpop.permute.xlu0 %1069
        %1073 = vrot.lane.b32.xlu0 %v993, 48
        %v1074 = vpop.permute.xlu0 %1073
        %1077 = vrot.lane.b32.xlu0 %v984, 64
        %v1078 = vpop.permute.xlu0 %1077
        %1081 = vrot.lane.b32.xlu0 %v994, 80
        %v1082 = vpop.permute.xlu0 %1081
        %1085 = vrot.lane.b32.xlu0 %v991, 96
        %v1086 = vpop.permute.xlu0 %1085
        %1089 = vrot.lane.b32.xlu0 %v995, 112
        %v1090 = vpop.permute.xlu0 %1089
        %1093 = vrot.lane.b32.xlu0 %v1060, 16
        %v1094 = vpop.permute.xlu0 %1093
        %1097 = vrot.lane.b32.xlu0 %v1043, 32
        %v1098 = vpop.permute.xlu0 %1097
        %1101 = vrot.lane.b32.xlu0 %v1061, 48
        %v1102 = vpop.permute.xlu0 %1101
        %1105 = vrot.lane.b32.xlu0 %v1052, 64
        %v1106 = vpop.permute.xlu0 %1105
        %1109 = vrot.lane.b32.xlu0 %v1062, 80
        %v1110 = vpop.permute.xlu0 %1109
        %1113 = vrot.lane.b32.xlu0 %v1059, 96
        %v1114 = vpop.permute.xlu0 %1113
        %1117 = vrot.lane.b32.xlu0 %v1063, 112
        %v1118 = vpop.permute.xlu0 %1117
        %v1120 = vsel %vm406, %v968, %v1066
        %v1121 = vsel %vm408, %v1120, %v1070
        %v1122 = vsel %vm410, %v1121, %v1074
        %v1123 = vsel %vm412, %v1122, %v1078
        %v1124 = vsel %vm414, %v1123, %v1082
        %v1125 = vsel %vm416, %v1124, %v1086
        %v1126 = vsel %vm418, %v1125, %v1090
        %v1127 = vsel %vm406, %v1036, %v1094
        %v1128 = vsel %vm408, %v1127, %v1098
        %v1129 = vsel %vm410, %v1128, %v1102
        %v1130 = vsel %vm412, %v1129, %v1106
        %v1131 = vsel %vm414, %v1130, %v1110
        %v1132 = vsel %vm416, %v1131, %v1114
        %v1133 = vsel %vm418, %v1132, %v1118
        %1134 = vrot.lane.b32.xlu0 %v902, 127
        %v1135 = vpop.permute.xlu0 %1134
        %1136 = vrot.lane.b32.xlu0 %v904, 127
        %v1137 = vpop.permute.xlu0 %1136
        %1138 = vrot.lane.b32.xlu0 %v907, 127
        %v1139 = vpop.permute.xlu0 %1138
        %1140 = vrot.lane.b32.xlu0 %v909, 127
        %v1141 = vpop.permute.xlu0 %1140
        %1142 = vrot.lane.b32.xlu0 %v912, 127
        %v1143 = vpop.permute.xlu0 %1142
        %1144 = vrot.lane.b32.xlu0 %v914, 127
        %v1145 = vpop.permute.xlu0 %1144
        %1146 = vrot.lane.b32.xlu0 %v917, 127
        %v1147 = vpop.permute.xlu0 %1146
        %1148 = vrot.lane.b32.xlu0 %v919, 127
        %v1149 = vpop.permute.xlu0 %1148
        %v1158 = vcombine.low %v1135, %v1143
        %v1159 = vcombine.high %v1135, %v1143
        %v1161 = vunpack.c.l.s4 1983009808
        %v1162 = vunpack.c.0.s8 %v1161
        %v1163 = vlaneseq
        %v1164 = vshrl.u32 %v1163, 7
        %v1165 = vsub.s32 %v1162, %v1164
        %v1166 = vrot.slane %v1158, %v1165
        %v1168 = vunpack.c.l.s4 1983009808
        %v1169 = vunpack.c.0.s8 %v1168
        %v1170 = vlaneseq
        %v1171 = vshrl.u32 %v1170, 7
        %v1172 = vsub.s32 %v1169, %v1171
        %v1173 = vrot.slane %v1159, %v1172
        %v1174 = vcombine.low %v1139, %v1147
        %v1175 = vcombine.high %v1139, %v1147
        %v1177 = vunpack.c.l.s4 1983009808
        %v1178 = vunpack.c.0.s8 %v1177
        %v1179 = vlaneseq
        %v1180 = vshrl.u32 %v1179, 7
        %v1181 = vsub.s32 %v1178, %v1180
        %v1182 = vrot.slane %v1174, %v1181
        %v1184 = vunpack.c.l.s4 1983009808
        %v1185 = vunpack.c.0.s8 %v1184
        %v1186 = vlaneseq
        %v1187 = vshrl.u32 %v1186, 7
        %v1188 = vsub.s32 %v1185, %v1187
        %v1189 = vrot.slane %v1175, %v1188
        %v1190 = vcombine.low %v1166, %v1182
        %v1191 = vcombine.high %v1166, %v1182
        %v1193 = vunpack.c.l.s4 1934713408
        %v1194 = vunpack.c.0.s8 %v1193
        %v1195 = vlaneseq
        %v1196 = vshrl.u32 %v1195, 7
        %v1197 = vsub.s32 %v1194, %v1196
        %v1198 = vrot.slane %v1190, %v1197
        %v1200 = vunpack.c.l.s4 1934713408
        %v1201 = vunpack.c.0.s8 %v1200
        %v1202 = vlaneseq
        %v1203 = vshrl.u32 %v1202, 7
        %v1204 = vsub.s32 %v1201, %v1203
        %v1205 = vrot.slane %v1191, %v1204
        %v1206 = vcombine.low %v1173, %v1189
        %v1207 = vcombine.high %v1173, %v1189
        %v1209 = vunpack.c.l.s4 1934713408
        %v1210 = vunpack.c.0.s8 %v1209
        %v1211 = vlaneseq
        %v1212 = vshrl.u32 %v1211, 7
        %v1213 = vsub.s32 %v1210, %v1212
        %v1214 = vrot.slane %v1206, %v1213
        %v1216 = vunpack.c.l.s4 1934713408
        %v1217 = vunpack.c.0.s8 %v1216
        %v1218 = vlaneseq
        %v1219 = vshrl.u32 %v1218, 7
        %v1220 = vsub.s32 %v1217, %v1219
        %v1221 = vrot.slane %v1207, %v1220
        %v1222 = vcombine.high %v1198, 0.0
        %v1223 = vcombine.high %v1205, 0.0
        %v1224 = vcombine.high %v1214, 0.0
        %v1225 = vcombine.high %v1221, 0.0
        %v1226 = vcombine.low %v1137, %v1145
        %v1227 = vcombine.high %v1137, %v1145
        %v1229 = vunpack.c.l.s4 1983009808
        %v1230 = vunpack.c.0.s8 %v1229
        %v1231 = vlaneseq
        %v1232 = vshrl.u32 %v1231, 7
        %v1233 = vsub.s32 %v1230, %v1232
        %v1234 = vrot.slane %v1226, %v1233
        %v1236 = vunpack.c.l.s4 1983009808
        %v1237 = vunpack.c.0.s8 %v1236
        %v1238 = vlaneseq
        %v1239 = vshrl.u32 %v1238, 7
        %v1240 = vsub.s32 %v1237, %v1239
        %v1241 = vrot.slane %v1227, %v1240
        %v1242 = vcombine.low %v1141, %v1149
        %v1243 = vcombine.high %v1141, %v1149
        %v1245 = vunpack.c.l.s4 1983009808
        %v1246 = vunpack.c.0.s8 %v1245
        %v1247 = vlaneseq
        %v1248 = vshrl.u32 %v1247, 7
        %v1249 = vsub.s32 %v1246, %v1248
        %v1250 = vrot.slane %v1242, %v1249
        %v1252 = vunpack.c.l.s4 1983009808
        %v1253 = vunpack.c.0.s8 %v1252
        %v1254 = vlaneseq
        %v1255 = vshrl.u32 %v1254, 7
        %v1256 = vsub.s32 %v1253, %v1255
        %v1257 = vrot.slane %v1243, %v1256
        %v1258 = vcombine.low %v1234, %v1250
        %v1259 = vcombine.high %v1234, %v1250
        %v1261 = vunpack.c.l.s4 1934713408
        %v1262 = vunpack.c.0.s8 %v1261
        %v1263 = vlaneseq
        %v1264 = vshrl.u32 %v1263, 7
        %v1265 = vsub.s32 %v1262, %v1264
        %v1266 = vrot.slane %v1258, %v1265
        %v1268 = vunpack.c.l.s4 1934713408
        %v1269 = vunpack.c.0.s8 %v1268
        %v1270 = vlaneseq
        %v1271 = vshrl.u32 %v1270, 7
        %v1272 = vsub.s32 %v1269, %v1271
        %v1273 = vrot.slane %v1259, %v1272
        %v1274 = vcombine.low %v1241, %v1257
        %v1275 = vcombine.high %v1241, %v1257
        %v1277 = vunpack.c.l.s4 1934713408
        %v1278 = vunpack.c.0.s8 %v1277
        %v1279 = vlaneseq
        %v1280 = vshrl.u32 %v1279, 7
        %v1281 = vsub.s32 %v1278, %v1280
        %v1282 = vrot.slane %v1274, %v1281
        %v1284 = vunpack.c.l.s4 1934713408
        %v1285 = vunpack.c.0.s8 %v1284
        %v1286 = vlaneseq
        %v1287 = vshrl.u32 %v1286, 7
        %v1288 = vsub.s32 %v1285, %v1287
        %v1289 = vrot.slane %v1275, %v1288
        %v1290 = vcombine.high %v1266, 0.0
        %v1291 = vcombine.high %v1273, 0.0
        %v1292 = vcombine.high %v1282, 0.0
        %v1293 = vcombine.high %v1289, 0.0
        %1295 = vrot.lane.b32.xlu0 %v1222, 16
        %v1296 = vpop.permute.xlu0 %1295
        %1299 = vrot.lane.b32.xlu0 %v1205, 32
        %v1300 = vpop.permute.xlu0 %1299
        %1303 = vrot.lane.b32.xlu0 %v1223, 48
        %v1304 = vpop.permute.xlu0 %1303
        %1307 = vrot.lane.b32.xlu0 %v1214, 64
        %v1308 = vpop.permute.xlu0 %1307
        %1311 = vrot.lane.b32.xlu0 %v1224, 80
        %v1312 = vpop.permute.xlu0 %1311
        %1315 = vrot.lane.b32.xlu0 %v1221, 96
        %v1316 = vpop.permute.xlu0 %1315
        %1319 = vrot.lane.b32.xlu0 %v1225, 112
        %v1320 = vpop.permute.xlu0 %1319
        %1323 = vrot.lane.b32.xlu0 %v1290, 16
        %v1324 = vpop.permute.xlu0 %1323
        %1327 = vrot.lane.b32.xlu0 %v1273, 32
        %v1328 = vpop.permute.xlu0 %1327
        %1331 = vrot.lane.b32.xlu0 %v1291, 48
        %v1332 = vpop.permute.xlu0 %1331
        %1335 = vrot.lane.b32.xlu0 %v1282, 64
        %v1336 = vpop.permute.xlu0 %1335
        %1339 = vrot.lane.b32.xlu0 %v1292, 80
        %v1340 = vpop.permute.xlu0 %1339
        %1343 = vrot.lane.b32.xlu0 %v1289, 96
        %v1344 = vpop.permute.xlu0 %1343
        %1347 = vrot.lane.b32.xlu0 %v1293, 112
        %v1348 = vpop.permute.xlu0 %1347
        %v1350 = vsel %vm406, %v1198, %v1296
        %v1351 = vsel %vm408, %v1350, %v1300
        %v1352 = vsel %vm410, %v1351, %v1304
        %v1353 = vsel %vm412, %v1352, %v1308
        %v1354 = vsel %vm414, %v1353, %v1312
        %v1355 = vsel %vm416, %v1354, %v1316
        %v1356 = vsel %vm418, %v1355, %v1320
        %v1357 = vsel %vm406, %v1266, %v1324
        %v1358 = vsel %vm408, %v1357, %v1328
        %v1359 = vsel %vm410, %v1358, %v1332
        %v1360 = vsel %vm412, %v1359, %v1336
        %v1361 = vsel %vm414, %v1360, %v1340
        %v1362 = vsel %vm416, %v1361, %v1344
        %v1363 = vsel %vm418, %v1362, %v1348
        %1364 = vrot.lane.b32.xlu0 %v902, 126
        %v1365 = vpop.permute.xlu0 %1364
        %1366 = vrot.lane.b32.xlu0 %v904, 126
        %v1367 = vpop.permute.xlu0 %1366
        %1368 = vrot.lane.b32.xlu0 %v907, 126
        %v1369 = vpop.permute.xlu0 %1368
        %1370 = vrot.lane.b32.xlu0 %v909, 126
        %v1371 = vpop.permute.xlu0 %1370
        %1372 = vrot.lane.b32.xlu0 %v912, 126
        %v1373 = vpop.permute.xlu0 %1372
        %1374 = vrot.lane.b32.xlu0 %v914, 126
        %v1375 = vpop.permute.xlu0 %1374
        %1376 = vrot.lane.b32.xlu0 %v917, 126
        %v1377 = vpop.permute.xlu0 %1376
        %1378 = vrot.lane.b32.xlu0 %v919, 126
        %v1379 = vpop.permute.xlu0 %1378
        %v1388 = vcombine.low %v1365, %v1373
        %v1389 = vcombine.high %v1365, %v1373
        %v1391 = vunpack.c.l.s4 1983009808
        %v1392 = vunpack.c.0.s8 %v1391
        %v1393 = vlaneseq
        %v1394 = vshrl.u32 %v1393, 7
        %v1395 = vsub.s32 %v1392, %v1394
        %v1396 = vrot.slane %v1388, %v1395
        %v1398 = vunpack.c.l.s4 1983009808
        %v1399 = vunpack.c.0.s8 %v1398
        %v1400 = vlaneseq
        %v1401 = vshrl.u32 %v1400, 7
        %v1402 = vsub.s32 %v1399, %v1401
        %v1403 = vrot.slane %v1389, %v1402
        %v1404 = vcombine.low %v1369, %v1377
        %v1405 = vcombine.high %v1369, %v1377
        %v1407 = vunpack.c.l.s4 1983009808
        %v1408 = vunpack.c.0.s8 %v1407
        %v1409 = vlaneseq
        %v1410 = vshrl.u32 %v1409, 7
        %v1411 = vsub.s32 %v1408, %v1410
        %v1412 = vrot.slane %v1404, %v1411
        %v1414 = vunpack.c.l.s4 1983009808
        %v1415 = vunpack.c.0.s8 %v1414
        %v1416 = vlaneseq
        %v1417 = vshrl.u32 %v1416, 7
        %v1418 = vsub.s32 %v1415, %v1417
        %v1419 = vrot.slane %v1405, %v1418
        %v1420 = vcombine.low %v1396, %v1412
        %v1421 = vcombine.high %v1396, %v1412
        %v1423 = vunpack.c.l.s4 1934713408
        %v1424 = vunpack.c.0.s8 %v1423
        %v1425 = vlaneseq
        %v1426 = vshrl.u32 %v1425, 7
        %v1427 = vsub.s32 %v1424, %v1426
        %v1428 = vrot.slane %v1420, %v1427
        %v1430 = vunpack.c.l.s4 1934713408
        %v1431 = vunpack.c.0.s8 %v1430
        %v1432 = vlaneseq
        %v1433 = vshrl.u32 %v1432, 7
        %v1434 = vsub.s32 %v1431, %v1433
        %v1435 = vrot.slane %v1421, %v1434
        %v1436 = vcombine.low %v1403, %v1419
        %v1437 = vcombine.high %v1403, %v1419
        %v1439 = vunpack.c.l.s4 1934713408
        %v1440 = vunpack.c.0.s8 %v1439
        %v1441 = vlaneseq
        %v1442 = vshrl.u32 %v1441, 7
        %v1443 = vsub.s32 %v1440, %v1442
        %v1444 = vrot.slane %v1436, %v1443
        %v1446 = vunpack.c.l.s4 1934713408
        %v1447 = vunpack.c.0.s8 %v1446
        %v1448 = vlaneseq
        %v1449 = vshrl.u32 %v1448, 7
        %v1450 = vsub.s32 %v1447, %v1449
        %v1451 = vrot.slane %v1437, %v1450
        %v1452 = vcombine.high %v1428, 0.0
        %v1453 = vcombine.high %v1435, 0.0
        %v1454 = vcombine.high %v1444, 0.0
        %v1455 = vcombine.high %v1451, 0.0
        %v1456 = vcombine.low %v1367, %v1375
        %v1457 = vcombine.high %v1367, %v1375
        %v1459 = vunpack.c.l.s4 1983009808
        %v1460 = vunpack.c.0.s8 %v1459
        %v1461 = vlaneseq
        %v1462 = vshrl.u32 %v1461, 7
        %v1463 = vsub.s32 %v1460, %v1462
        %v1464 = vrot.slane %v1456, %v1463
        %v1466 = vunpack.c.l.s4 1983009808
        %v1467 = vunpack.c.0.s8 %v1466
        %v1468 = vlaneseq
        %v1469 = vshrl.u32 %v1468, 7
        %v1470 = vsub.s32 %v1467, %v1469
        %v1471 = vrot.slane %v1457, %v1470
        %v1472 = vcombine.low %v1371, %v1379
        %v1473 = vcombine.high %v1371, %v1379
        %v1475 = vunpack.c.l.s4 1983009808
        %v1476 = vunpack.c.0.s8 %v1475
        %v1477 = vlaneseq
        %v1478 = vshrl.u32 %v1477, 7
        %v1479 = vsub.s32 %v1476, %v1478
        %v1480 = vrot.slane %v1472, %v1479
        %v1482 = vunpack.c.l.s4 1983009808
        %v1483 = vunpack.c.0.s8 %v1482
        %v1484 = vlaneseq
        %v1485 = vshrl.u32 %v1484, 7
        %v1486 = vsub.s32 %v1483, %v1485
        %v1487 = vrot.slane %v1473, %v1486
        %v1488 = vcombine.low %v1464, %v1480
        %v1489 = vcombine.high %v1464, %v1480
        %v1491 = vunpack.c.l.s4 1934713408
        %v1492 = vunpack.c.0.s8 %v1491
        %v1493 = vlaneseq
        %v1494 = vshrl.u32 %v1493, 7
        %v1495 = vsub.s32 %v1492, %v1494
        %v1496 = vrot.slane %v1488, %v1495
        %v1498 = vunpack.c.l.s4 1934713408
        %v1499 = vunpack.c.0.s8 %v1498
        %v1500 = vlaneseq
        %v1501 = vshrl.u32 %v1500, 7
        %v1502 = vsub.s32 %v1499, %v1501
        %v1503 = vrot.slane %v1489, %v1502
        %v1504 = vcombine.low %v1471, %v1487
        %v1505 = vcombine.high %v1471, %v1487
        %v1507 = vunpack.c.l.s4 1934713408
        %v1508 = vunpack.c.0.s8 %v1507
        %v1509 = vlaneseq
        %v1510 = vshrl.u32 %v1509, 7
        %v1511 = vsub.s32 %v1508, %v1510
        %v1512 = vrot.slane %v1504, %v1511
        %v1514 = vunpack.c.l.s4 1934713408
        %v1515 = vunpack.c.0.s8 %v1514
        %v1516 = vlaneseq
        %v1517 = vshrl.u32 %v1516, 7
        %v1518 = vsub.s32 %v1515, %v1517
        %v1519 = vrot.slane %v1505, %v1518
        %v1520 = vcombine.high %v1496, 0.0
        %v1521 = vcombine.high %v1503, 0.0
        %v1522 = vcombine.high %v1512, 0.0
        %v1523 = vcombine.high %v1519, 0.0
        %1525 = vrot.lane.b32.xlu0 %v1452, 16
        %v1526 = vpop.permute.xlu0 %1525
        %1529 = vrot.lane.b32.xlu0 %v1435, 32
        %v1530 = vpop.permute.xlu0 %1529
        %1533 = vrot.lane.b32.xlu0 %v1453, 48
        %v1534 = vpop.permute.xlu0 %1533
        %1537 = vrot.lane.b32.xlu0 %v1444, 64
        %v1538 = vpop.permute.xlu0 %1537
        %1541 = vrot.lane.b32.xlu0 %v1454, 80
        %v1542 = vpop.permute.xlu0 %1541
        %1545 = vrot.lane.b32.xlu0 %v1451, 96
        %v1546 = vpop.permute.xlu0 %1545
        %1549 = vrot.lane.b32.xlu0 %v1455, 112
        %v1550 = vpop.permute.xlu0 %1549
        %1553 = vrot.lane.b32.xlu0 %v1520, 16
        %v1554 = vpop.permute.xlu0 %1553
        %1557 = vrot.lane.b32.xlu0 %v1503, 32
        %v1558 = vpop.permute.xlu0 %1557
        %1561 = vrot.lane.b32.xlu0 %v1521, 48
        %v1562 = vpop.permute.xlu0 %1561
        %1565 = vrot.lane.b32.xlu0 %v1512, 64
        %v1566 = vpop.permute.xlu0 %1565
        %1569 = vrot.lane.b32.xlu0 %v1522, 80
        %v1570 = vpop.permute.xlu0 %1569
        %1573 = vrot.lane.b32.xlu0 %v1519, 96
        %v1574 = vpop.permute.xlu0 %1573
        %1577 = vrot.lane.b32.xlu0 %v1523, 112
        %v1578 = vpop.permute.xlu0 %1577
        %v1580 = vsel %vm406, %v1428, %v1526
        %v1581 = vsel %vm408, %v1580, %v1530
        %v1582 = vsel %vm410, %v1581, %v1534
        %v1583 = vsel %vm412, %v1582, %v1538
        %v1584 = vsel %vm414, %v1583, %v1542
        %v1585 = vsel %vm416, %v1584, %v1546
        %v1586 = vsel %vm418, %v1585, %v1550
        %v1587 = vsel %vm406, %v1496, %v1554
        %v1588 = vsel %vm408, %v1587, %v1558
        %v1589 = vsel %vm410, %v1588, %v1562
        %v1590 = vsel %vm412, %v1589, %v1566
        %v1591 = vsel %vm414, %v1590, %v1570
        %v1592 = vsel %vm416, %v1591, %v1574
        %v1593 = vsel %vm418, %v1592, %v1578
        %vm1594 = vcmask 1045504
        %v1595 = vrot.slane %v202, 2
        %v1596 = vrot.slane %v203, 2
        %v1597 = vsel %vm1594, %v1595, %v1596
        %v1598 = vrot.slane %v204, 2
        %v1599 = vsel %vm1594, %v1596, %v1598
        %v1600 = vrot.slane %v205, 2
        %v1601 = vrot.slane %v206, 2
        %v1602 = vsel %vm1594, %v1600, %v1601
        %v1603 = vrot.slane %v207, 2
        %v1604 = vsel %vm1594, %v1601, %v1603
        %v1605 = vrot.slane %v208, 2
        %v1606 = vrot.slane %v209, 2
        %v1607 = vsel %vm1594, %v1605, %v1606
        %v1608 = vrot.slane %v210, 2
        %v1609 = vsel %vm1594, %v1606, %v1608
        %v1610 = vrot.slane %v211, 2
        %v1611 = vrot.slane %v212, 2
        %v1612 = vsel %vm1594, %v1610, %v1611
        %v1613 = vrot.slane %v213, 2
        %v1614 = vsel %vm1594, %v1611, %v1613
        %v1623 = vcombine.low %v1597, %v1607
        %v1624 = vcombine.high %v1597, %v1607
        %v1626 = vunpack.c.l.s4 1983009808
        %v1627 = vunpack.c.0.s8 %v1626
        %v1628 = vlaneseq
        %v1629 = vshrl.u32 %v1628, 7
        %v1630 = vsub.s32 %v1627, %v1629
        %v1631 = vrot.slane %v1623, %v1630
        %v1633 = vunpack.c.l.s4 1983009808
        %v1634 = vunpack.c.0.s8 %v1633
        %v1635 = vlaneseq
        %v1636 = vshrl.u32 %v1635, 7
        %v1637 = vsub.s32 %v1634, %v1636
        %v1638 = vrot.slane %v1624, %v1637
        %v1639 = vcombine.low %v1602, %v1612
        %v1640 = vcombine.high %v1602, %v1612
        %v1642 = vunpack.c.l.s4 1983009808
        %v1643 = vunpack.c.0.s8 %v1642
        %v1644 = vlaneseq
        %v1645 = vshrl.u32 %v1644, 7
        %v1646 = vsub.s32 %v1643, %v1645
        %v1647 = vrot.slane %v1639, %v1646
        %v1649 = vunpack.c.l.s4 1983009808
        %v1650 = vunpack.c.0.s8 %v1649
        %v1651 = vlaneseq
        %v1652 = vshrl.u32 %v1651, 7
        %v1653 = vsub.s32 %v1650, %v1652
        %v1654 = vrot.slane %v1640, %v1653
        %v1655 = vcombine.low %v1631, %v1647
        %v1656 = vcombine.high %v1631, %v1647
        %v1658 = vunpack.c.l.s4 1934713408
        %v1659 = vunpack.c.0.s8 %v1658
        %v1660 = vlaneseq
        %v1661 = vshrl.u32 %v1660, 7
        %v1662 = vsub.s32 %v1659, %v1661
        %v1663 = vrot.slane %v1655, %v1662
        %v1665 = vunpack.c.l.s4 1934713408
        %v1666 = vunpack.c.0.s8 %v1665
        %v1667 = vlaneseq
        %v1668 = vshrl.u32 %v1667, 7
        %v1669 = vsub.s32 %v1666, %v1668
        %v1670 = vrot.slane %v1656, %v1669
        %v1671 = vcombine.low %v1638, %v1654
        %v1672 = vcombine.high %v1638, %v1654
        %v1674 = vunpack.c.l.s4 1934713408
        %v1675 = vunpack.c.0.s8 %v1674
        %v1676 = vlaneseq
        %v1677 = vshrl.u32 %v1676, 7
        %v1678 = vsub.s32 %v1675, %v1677
        %v1679 = vrot.slane %v1671, %v1678
        %v1681 = vunpack.c.l.s4 1934713408
        %v1682 = vunpack.c.0.s8 %v1681
        %v1683 = vlaneseq
        %v1684 = vshrl.u32 %v1683, 7
        %v1685 = vsub.s32 %v1682, %v1684
        %v1686 = vrot.slane %v1672, %v1685
        %v1687 = vcombine.high %v1663, 0.0
        %v1688 = vcombine.high %v1670, 0.0
        %v1689 = vcombine.high %v1679, 0.0
        %v1690 = vcombine.high %v1686, 0.0
        %v1691 = vcombine.low %v1599, %v1609
        %v1692 = vcombine.high %v1599, %v1609
        %v1694 = vunpack.c.l.s4 1983009808
        %v1695 = vunpack.c.0.s8 %v1694
        %v1696 = vlaneseq
        %v1697 = vshrl.u32 %v1696, 7
        %v1698 = vsub.s32 %v1695, %v1697
        %v1699 = vrot.slane %v1691, %v1698
        %v1701 = vunpack.c.l.s4 1983009808
        %v1702 = vunpack.c.0.s8 %v1701
        %v1703 = vlaneseq
        %v1704 = vshrl.u32 %v1703, 7
        %v1705 = vsub.s32 %v1702, %v1704
        %v1706 = vrot.slane %v1692, %v1705
        %v1707 = vcombine.low %v1604, %v1614
        %v1708 = vcombine.high %v1604, %v1614
        %v1710 = vunpack.c.l.s4 1983009808
        %v1711 = vunpack.c.0.s8 %v1710
        %v1712 = vlaneseq
        %v1713 = vshrl.u32 %v1712, 7
        %v1714 = vsub.s32 %v1711, %v1713
        %v1715 = vrot.slane %v1707, %v1714
        %v1717 = vunpack.c.l.s4 1983009808
        %v1718 = vunpack.c.0.s8 %v1717
        %v1719 = vlaneseq
        %v1720 = vshrl.u32 %v1719, 7
        %v1721 = vsub.s32 %v1718, %v1720
        %v1722 = vrot.slane %v1708, %v1721
        %v1723 = vcombine.low %v1699, %v1715
        %v1724 = vcombine.high %v1699, %v1715
        %v1726 = vunpack.c.l.s4 1934713408
        %v1727 = vunpack.c.0.s8 %v1726
        %v1728 = vlaneseq
        %v1729 = vshrl.u32 %v1728, 7
        %v1730 = vsub.s32 %v1727, %v1729
        %v1731 = vrot.slane %v1723, %v1730
        %v1733 = vunpack.c.l.s4 1934713408
        %v1734 = vunpack.c.0.s8 %v1733
        %v1735 = vlaneseq
        %v1736 = vshrl.u32 %v1735, 7
        %v1737 = vsub.s32 %v1734, %v1736
        %v1738 = vrot.slane %v1724, %v1737
        %v1739 = vcombine.low %v1706, %v1722
        %v1740 = vcombine.high %v1706, %v1722
        %v1742 = vunpack.c.l.s4 1934713408
        %v1743 = vunpack.c.0.s8 %v1742
        %v1744 = vlaneseq
        %v1745 = vshrl.u32 %v1744, 7
        %v1746 = vsub.s32 %v1743, %v1745
        %v1747 = vrot.slane %v1739, %v1746
        %v1749 = vunpack.c.l.s4 1934713408
        %v1750 = vunpack.c.0.s8 %v1749
        %v1751 = vlaneseq
        %v1752 = vshrl.u32 %v1751, 7
        %v1753 = vsub.s32 %v1750, %v1752
        %v1754 = vrot.slane %v1740, %v1753
        %v1755 = vcombine.high %v1731, 0.0
        %v1756 = vcombine.high %v1738, 0.0
        %v1757 = vcombine.high %v1747, 0.0
        %v1758 = vcombine.high %v1754, 0.0
        %1760 = vrot.lane.b32.xlu0 %v1687, 16
        %v1761 = vpop.permute.xlu0 %1760
        %1764 = vrot.lane.b32.xlu0 %v1670, 32
        %v1765 = vpop.permute.xlu0 %1764
        %1768 = vrot.lane.b32.xlu0 %v1688, 48
        %v1769 = vpop.permute.xlu0 %1768
        %1772 = vrot.lane.b32.xlu0 %v1679, 64
        %v1773 = vpop.permute.xlu0 %1772
        %1776 = vrot.lane.b32.xlu0 %v1689, 80
        %v1777 = vpop.permute.xlu0 %1776
        %1780 = vrot.lane.b32.xlu0 %v1686, 96
        %v1781 = vpop.permute.xlu0 %1780
        %1784 = vrot.lane.b32.xlu0 %v1690, 112
        %v1785 = vpop.permute.xlu0 %1784
        %1788 = vrot.lane.b32.xlu0 %v1755, 16
        %v1789 = vpop.permute.xlu0 %1788
        %1792 = vrot.lane.b32.xlu0 %v1738, 32
        %v1793 = vpop.permute.xlu0 %1792
        %1796 = vrot.lane.b32.xlu0 %v1756, 48
        %v1797 = vpop.permute.xlu0 %1796
        %1800 = vrot.lane.b32.xlu0 %v1747, 64
        %v1801 = vpop.permute.xlu0 %1800
        %1804 = vrot.lane.b32.xlu0 %v1757, 80
        %v1805 = vpop.permute.xlu0 %1804
        %1808 = vrot.lane.b32.xlu0 %v1754, 96
        %v1809 = vpop.permute.xlu0 %1808
        %1812 = vrot.lane.b32.xlu0 %v1758, 112
        %v1813 = vpop.permute.xlu0 %1812
        %v1815 = vsel %vm406, %v1663, %v1761
        %v1816 = vsel %vm408, %v1815, %v1765
        %v1817 = vsel %vm410, %v1816, %v1769
        %v1818 = vsel %vm412, %v1817, %v1773
        %v1819 = vsel %vm414, %v1818, %v1777
        %v1820 = vsel %vm416, %v1819, %v1781
        %v1821 = vsel %vm418, %v1820, %v1785
        %v1822 = vsel %vm406, %v1731, %v1789
        %v1823 = vsel %vm408, %v1822, %v1793
        %v1824 = vsel %vm410, %v1823, %v1797
        %v1825 = vsel %vm412, %v1824, %v1801
        %v1826 = vsel %vm414, %v1825, %v1805
        %v1827 = vsel %vm416, %v1826, %v1809
        %v1828 = vsel %vm418, %v1827, %v1813
        %1829 = vrot.lane.b32.xlu0 %v1597, 127
        %v1830 = vpop.permute.xlu0 %1829
        %1831 = vrot.lane.b32.xlu0 %v1599, 127
        %v1832 = vpop.permute.xlu0 %1831
        %1833 = vrot.lane.b32.xlu0 %v1602, 127
        %v1834 = vpop.permute.xlu0 %1833
        %1835 = vrot.lane.b32.xlu0 %v1604, 127
        %v1836 = vpop.permute.xlu0 %1835
        %1837 = vrot.lane.b32.xlu0 %v1607, 127
        %v1838 = vpop.permute.xlu0 %1837
        %1839 = vrot.lane.b32.xlu0 %v1609, 127
        %v1840 = vpop.permute.xlu0 %1839
        %1841 = vrot.lane.b32.xlu0 %v1612, 127
        %v1842 = vpop.permute.xlu0 %1841
        %1843 = vrot.lane.b32.xlu0 %v1614, 127
        %v1844 = vpop.permute.xlu0 %1843
        %v1853 = vcombine.low %v1830, %v1838
        %v1854 = vcombine.high %v1830, %v1838
        %v1856 = vunpack.c.l.s4 1983009808
        %v1857 = vunpack.c.0.s8 %v1856
        %v1858 = vlaneseq
        %v1859 = vshrl.u32 %v1858, 7
        %v1860 = vsub.s32 %v1857, %v1859
        %v1861 = vrot.slane %v1853, %v1860
        %v1863 = vunpack.c.l.s4 1983009808
        %v1864 = vunpack.c.0.s8 %v1863
        %v1865 = vlaneseq
        %v1866 = vshrl.u32 %v1865, 7
        %v1867 = vsub.s32 %v1864, %v1866
        %v1868 = vrot.slane %v1854, %v1867
        %v1869 = vcombine.low %v1834, %v1842
        %v1870 = vcombine.high %v1834, %v1842
        %v1872 = vunpack.c.l.s4 1983009808
        %v1873 = vunpack.c.0.s8 %v1872
        %v1874 = vlaneseq
        %v1875 = vshrl.u32 %v1874, 7
        %v1876 = vsub.s32 %v1873, %v1875
        %v1877 = vrot.slane %v1869, %v1876
        %v1879 = vunpack.c.l.s4 1983009808
        %v1880 = vunpack.c.0.s8 %v1879
        %v1881 = vlaneseq
        %v1882 = vshrl.u32 %v1881, 7
        %v1883 = vsub.s32 %v1880, %v1882
        %v1884 = vrot.slane %v1870, %v1883
        %v1885 = vcombine.low %v1861, %v1877
        %v1886 = vcombine.high %v1861, %v1877
        %v1888 = vunpack.c.l.s4 1934713408
        %v1889 = vunpack.c.0.s8 %v1888
        %v1890 = vlaneseq
        %v1891 = vshrl.u32 %v1890, 7
        %v1892 = vsub.s32 %v1889, %v1891
        %v1893 = vrot.slane %v1885, %v1892
        %v1895 = vunpack.c.l.s4 1934713408
        %v1896 = vunpack.c.0.s8 %v1895
        %v1897 = vlaneseq
        %v1898 = vshrl.u32 %v1897, 7
        %v1899 = vsub.s32 %v1896, %v1898
        %v1900 = vrot.slane %v1886, %v1899
        %v1901 = vcombine.low %v1868, %v1884
        %v1902 = vcombine.high %v1868, %v1884
        %v1904 = vunpack.c.l.s4 1934713408
        %v1905 = vunpack.c.0.s8 %v1904
        %v1906 = vlaneseq
        %v1907 = vshrl.u32 %v1906, 7
        %v1908 = vsub.s32 %v1905, %v1907
        %v1909 = vrot.slane %v1901, %v1908
        %v1911 = vunpack.c.l.s4 1934713408
        %v1912 = vunpack.c.0.s8 %v1911
        %v1913 = vlaneseq
        %v1914 = vshrl.u32 %v1913, 7
        %v1915 = vsub.s32 %v1912, %v1914
        %v1916 = vrot.slane %v1902, %v1915
        %v1917 = vcombine.high %v1893, 0.0
        %v1918 = vcombine.high %v1900, 0.0
        %v1919 = vcombine.high %v1909, 0.0
        %v1920 = vcombine.high %v1916, 0.0
        %v1921 = vcombine.low %v1832, %v1840
        %v1922 = vcombine.high %v1832, %v1840
        %v1924 = vunpack.c.l.s4 1983009808
        %v1925 = vunpack.c.0.s8 %v1924
        %v1926 = vlaneseq
        %v1927 = vshrl.u32 %v1926, 7
        %v1928 = vsub.s32 %v1925, %v1927
        %v1929 = vrot.slane %v1921, %v1928
        %v1931 = vunpack.c.l.s4 1983009808
        %v1932 = vunpack.c.0.s8 %v1931
        %v1933 = vlaneseq
        %v1934 = vshrl.u32 %v1933, 7
        %v1935 = vsub.s32 %v1932, %v1934
        %v1936 = vrot.slane %v1922, %v1935
        %v1937 = vcombine.low %v1836, %v1844
        %v1938 = vcombine.high %v1836, %v1844
        %v1940 = vunpack.c.l.s4 1983009808
        %v1941 = vunpack.c.0.s8 %v1940
        %v1942 = vlaneseq
        %v1943 = vshrl.u32 %v1942, 7
        %v1944 = vsub.s32 %v1941, %v1943
        %v1945 = vrot.slane %v1937, %v1944
        %v1947 = vunpack.c.l.s4 1983009808
        %v1948 = vunpack.c.0.s8 %v1947
        %v1949 = vlaneseq
        %v1950 = vshrl.u32 %v1949, 7
        %v1951 = vsub.s32 %v1948, %v1950
        %v1952 = vrot.slane %v1938, %v1951
        %v1953 = vcombine.low %v1929, %v1945
        %v1954 = vcombine.high %v1929, %v1945
        %v1956 = vunpack.c.l.s4 1934713408
        %v1957 = vunpack.c.0.s8 %v1956
        %v1958 = vlaneseq
        %v1959 = vshrl.u32 %v1958, 7
        %v1960 = vsub.s32 %v1957, %v1959
        %v1961 = vrot.slane %v1953, %v1960
        %v1963 = vunpack.c.l.s4 1934713408
        %v1964 = vunpack.c.0.s8 %v1963
        %v1965 = vlaneseq
        %v1966 = vshrl.u32 %v1965, 7
        %v1967 = vsub.s32 %v1964, %v1966
        %v1968 = vrot.slane %v1954, %v1967
        %v1969 = vcombine.low %v1936, %v1952
        %v1970 = vcombine.high %v1936, %v1952
        %v1972 = vunpack.c.l.s4 1934713408
        %v1973 = vunpack.c.0.s8 %v1972
        %v1974 = vlaneseq
        %v1975 = vshrl.u32 %v1974, 7
        %v1976 = vsub.s32 %v1973, %v1975
        %v1977 = vrot.slane %v1969, %v1976
        %v1979 = vunpack.c.l.s4 1934713408
        %v1980 = vunpack.c.0.s8 %v1979
        %v1981 = vlaneseq
        %v1982 = vshrl.u32 %v1981, 7
        %v1983 = vsub.s32 %v1980, %v1982
        %v1984 = vrot.slane %v1970, %v1983
        %v1985 = vcombine.high %v1961, 0.0
        %v1986 = vcombine.high %v1968, 0.0
        %v1987 = vcombine.high %v1977, 0.0
        %v1988 = vcombine.high %v1984, 0.0
        %1990 = vrot.lane.b32.xlu0 %v1917, 16
        %v1991 = vpop.permute.xlu0 %1990
        %1994 = vrot.lane.b32.xlu0 %v1900, 32
        %v1995 = vpop.permute.xlu0 %1994
        %1998 = vrot.lane.b32.xlu0 %v1918, 48
        %v1999 = vpop.permute.xlu0 %1998
        %2002 = vrot.lane.b32.xlu0 %v1909, 64
        %v2003 = vpop.permute.xlu0 %2002
        %2006 = vrot.lane.b32.xlu0 %v1919, 80
        %v2007 = vpop.permute.xlu0 %2006
        %2010 = vrot.lane.b32.xlu0 %v1916, 96
        %v2011 = vpop.permute.xlu0 %2010
        %2014 = vrot.lane.b32.xlu0 %v1920, 112
        %v2015 = vpop.permute.xlu0 %2014
        %2018 = vrot.lane.b32.xlu0 %v1985, 16
        %v2019 = vpop.permute.xlu0 %2018
        %2022 = vrot.lane.b32.xlu0 %v1968, 32
        %v2023 = vpop.permute.xlu0 %2022
        %2026 = vrot.lane.b32.xlu0 %v1986, 48
        %v2027 = vpop.permute.xlu0 %2026
        %2030 = vrot.lane.b32.xlu0 %v1977, 64
        %v2031 = vpop.permute.xlu0 %2030
        %2034 = vrot.lane.b32.xlu0 %v1987, 80
        %v2035 = vpop.permute.xlu0 %2034
        %2038 = vrot.lane.b32.xlu0 %v1984, 96
        %v2039 = vpop.permute.xlu0 %2038
        %2042 = vrot.lane.b32.xlu0 %v1988, 112
        %v2043 = vpop.permute.xlu0 %2042
        %v2045 = vsel %vm406, %v1893, %v1991
        %v2046 = vsel %vm408, %v2045, %v1995
        %v2047 = vsel %vm410, %v2046, %v1999
        %v2048 = vsel %vm412, %v2047, %v2003
        %v2049 = vsel %vm414, %v2048, %v2007
        %v2050 = vsel %vm416, %v2049, %v2011
        %v2051 = vsel %vm418, %v2050, %v2015
        %v2052 = vsel %vm406, %v1961, %v2019
        %v2053 = vsel %vm408, %v2052, %v2023
        %v2054 = vsel %vm410, %v2053, %v2027
        %v2055 = vsel %vm412, %v2054, %v2031
        %v2056 = vsel %vm414, %v2055, %v2035
        %v2057 = vsel %vm416, %v2056, %v2039
        %v2058 = vsel %vm418, %v2057, %v2043
        %2059 = vrot.lane.b32.xlu0 %v1597, 126
        %v2060 = vpop.permute.xlu0 %2059
        %2061 = vrot.lane.b32.xlu0 %v1599, 126
        %v2062 = vpop.permute.xlu0 %2061
        %2063 = vrot.lane.b32.xlu0 %v1602, 126
        %v2064 = vpop.permute.xlu0 %2063
        %2065 = vrot.lane.b32.xlu0 %v1604, 126
        %v2066 = vpop.permute.xlu0 %2065
        %2067 = vrot.lane.b32.xlu0 %v1607, 126
        %v2068 = vpop.permute.xlu0 %2067
        %2069 = vrot.lane.b32.xlu0 %v1609, 126
        %v2070 = vpop.permute.xlu0 %2069
        %2071 = vrot.lane.b32.xlu0 %v1612, 126
        %v2072 = vpop.permute.xlu0 %2071
        %2073 = vrot.lane.b32.xlu0 %v1614, 126
        %v2074 = vpop.permute.xlu0 %2073
        %v2083 = vcombine.low %v2060, %v2068
        %v2084 = vcombine.high %v2060, %v2068
        %v2086 = vunpack.c.l.s4 1983009808
        %v2087 = vunpack.c.0.s8 %v2086
        %v2088 = vlaneseq
        %v2089 = vshrl.u32 %v2088, 7
        %v2090 = vsub.s32 %v2087, %v2089
        %v2091 = vrot.slane %v2083, %v2090
        %v2093 = vunpack.c.l.s4 1983009808
        %v2094 = vunpack.c.0.s8 %v2093
        %v2095 = vlaneseq
        %v2096 = vshrl.u32 %v2095, 7
        %v2097 = vsub.s32 %v2094, %v2096
        %v2098 = vrot.slane %v2084, %v2097
        %v2099 = vcombine.low %v2064, %v2072
        %v2100 = vcombine.high %v2064, %v2072
        %v2102 = vunpack.c.l.s4 1983009808
        %v2103 = vunpack.c.0.s8 %v2102
        %v2104 = vlaneseq
        %v2105 = vshrl.u32 %v2104, 7
        %v2106 = vsub.s32 %v2103, %v2105
        %v2107 = vrot.slane %v2099, %v2106
        %v2109 = vunpack.c.l.s4 1983009808
        %v2110 = vunpack.c.0.s8 %v2109
        %v2111 = vlaneseq
        %v2112 = vshrl.u32 %v2111, 7
        %v2113 = vsub.s32 %v2110, %v2112
        %v2114 = vrot.slane %v2100, %v2113
        %v2115 = vcombine.low %v2091, %v2107
        %v2116 = vcombine.high %v2091, %v2107
        %v2118 = vunpack.c.l.s4 1934713408
        %v2119 = vunpack.c.0.s8 %v2118
        %v2120 = vlaneseq
        %v2121 = vshrl.u32 %v2120, 7
        %v2122 = vsub.s32 %v2119, %v2121
        %v2123 = vrot.slane %v2115, %v2122
        %v2125 = vunpack.c.l.s4 1934713408
        %v2126 = vunpack.c.0.s8 %v2125
        %v2127 = vlaneseq
        %v2128 = vshrl.u32 %v2127, 7
        %v2129 = vsub.s32 %v2126, %v2128
        %v2130 = vrot.slane %v2116, %v2129
        %v2131 = vcombine.low %v2098, %v2114
        %v2132 = vcombine.high %v2098, %v2114
        %v2134 = vunpack.c.l.s4 1934713408
        %v2135 = vunpack.c.0.s8 %v2134
        %v2136 = vlaneseq
        %v2137 = vshrl.u32 %v2136, 7
        %v2138 = vsub.s32 %v2135, %v2137
        %v2139 = vrot.slane %v2131, %v2138
        %v2141 = vunpack.c.l.s4 1934713408
        %v2142 = vunpack.c.0.s8 %v2141
        %v2143 = vlaneseq
        %v2144 = vshrl.u32 %v2143, 7
        %v2145 = vsub.s32 %v2142, %v2144
        %v2146 = vrot.slane %v2132, %v2145
        %v2147 = vcombine.high %v2123, 0.0
        %v2148 = vcombine.high %v2130, 0.0
        %v2149 = vcombine.high %v2139, 0.0
        %v2150 = vcombine.high %v2146, 0.0
        %v2151 = vcombine.low %v2062, %v2070
        %v2152 = vcombine.high %v2062, %v2070
        %v2154 = vunpack.c.l.s4 1983009808
        %v2155 = vunpack.c.0.s8 %v2154
        %v2156 = vlaneseq
        %v2157 = vshrl.u32 %v2156, 7
        %v2158 = vsub.s32 %v2155, %v2157
        %v2159 = vrot.slane %v2151, %v2158
        %v2161 = vunpack.c.l.s4 1983009808
        %v2162 = vunpack.c.0.s8 %v2161
        %v2163 = vlaneseq
        %v2164 = vshrl.u32 %v2163, 7
        %v2165 = vsub.s32 %v2162, %v2164
        %v2166 = vrot.slane %v2152, %v2165
        %v2167 = vcombine.low %v2066, %v2074
        %v2168 = vcombine.high %v2066, %v2074
        %v2170 = vunpack.c.l.s4 1983009808
        %v2171 = vunpack.c.0.s8 %v2170
        %v2172 = vlaneseq
        %v2173 = vshrl.u32 %v2172, 7
        %v2174 = vsub.s32 %v2171, %v2173
        %v2175 = vrot.slane %v2167, %v2174
        %v2177 = vunpack.c.l.s4 1983009808
        %v2178 = vunpack.c.0.s8 %v2177
        %v2179 = vlaneseq
        %v2180 = vshrl.u32 %v2179, 7
        %v2181 = vsub.s32 %v2178, %v2180
        %v2182 = vrot.slane %v2168, %v2181
        %v2183 = vcombine.low %v2159, %v2175
        %v2184 = vcombine.high %v2159, %v2175
        %v2186 = vunpack.c.l.s4 1934713408
        %v2187 = vunpack.c.0.s8 %v2186
        %v2188 = vlaneseq
        %v2189 = vshrl.u32 %v2188, 7
        %v2190 = vsub.s32 %v2187, %v2189
        %v2191 = vrot.slane %v2183, %v2190
        %v2193 = vunpack.c.l.s4 1934713408
        %v2194 = vunpack.c.0.s8 %v2193
        %v2195 = vlaneseq
        %v2196 = vshrl.u32 %v2195, 7
        %v2197 = vsub.s32 %v2194, %v2196
        %v2198 = vrot.slane %v2184, %v2197
        %v2199 = vcombine.low %v2166, %v2182
        %v2200 = vcombine.high %v2166, %v2182
        %v2202 = vunpack.c.l.s4 1934713408
        %v2203 = vunpack.c.0.s8 %v2202
        %v2204 = vlaneseq
        %v2205 = vshrl.u32 %v2204, 7
        %v2206 = vsub.s32 %v2203, %v2205
        %v2207 = vrot.slane %v2199, %v2206
        %v2209 = vunpack.c.l.s4 1934713408
        %v2210 = vunpack.c.0.s8 %v2209
        %v2211 = vlaneseq
        %v2212 = vshrl.u32 %v2211, 7
        %v2213 = vsub.s32 %v2210, %v2212
        %v2214 = vrot.slane %v2200, %v2213
        %v2215 = vcombine.high %v2191, 0.0
        %v2216 = vcombine.high %v2198, 0.0
        %v2217 = vcombine.high %v2207, 0.0
        %v2218 = vcombine.high %v2214, 0.0
        %2220 = vrot.lane.b32.xlu0 %v2147, 16
        %v2221 = vpop.permute.xlu0 %2220
        %2224 = vrot.lane.b32.xlu0 %v2130, 32
        %v2225 = vpop.permute.xlu0 %2224
        %2228 = vrot.lane.b32.xlu0 %v2148, 48
        %v2229 = vpop.permute.xlu0 %2228
        %2232 = vrot.lane.b32.xlu0 %v2139, 64
        %v2233 = vpop.permute.xlu0 %2232
        %2236 = vrot.lane.b32.xlu0 %v2149, 80
        %v2237 = vpop.permute.xlu0 %2236
        %2240 = vrot.lane.b32.xlu0 %v2146, 96
        %v2241 = vpop.permute.xlu0 %2240
        %2244 = vrot.lane.b32.xlu0 %v2150, 112
        %v2245 = vpop.permute.xlu0 %2244
        %2248 = vrot.lane.b32.xlu0 %v2215, 16
        %v2249 = vpop.permute.xlu0 %2248
        %2252 = vrot.lane.b32.xlu0 %v2198, 32
        %v2253 = vpop.permute.xlu0 %2252
        %2256 = vrot.lane.b32.xlu0 %v2216, 48
        %v2257 = vpop.permute.xlu0 %2256
        %2260 = vrot.lane.b32.xlu0 %v2207, 64
        %v2261 = vpop.permute.xlu0 %2260
        %2264 = vrot.lane.b32.xlu0 %v2217, 80
        %v2265 = vpop.permute.xlu0 %2264
        %2268 = vrot.lane.b32.xlu0 %v2214, 96
        %v2269 = vpop.permute.xlu0 %2268
        %2272 = vrot.lane.b32.xlu0 %v2218, 112
        %v2273 = vpop.permute.xlu0 %2272
        %v2275 = vsel %vm406, %v2123, %v2221
        %v2276 = vsel %vm408, %v2275, %v2225
        %v2277 = vsel %vm410, %v2276, %v2229
        %v2278 = vsel %vm412, %v2277, %v2233
        %v2279 = vsel %vm414, %v2278, %v2237
        %v2280 = vsel %vm416, %v2279, %v2241
        %v2281 = vsel %vm418, %v2280, %v2245
        %v2282 = vsel %vm406, %v2191, %v2249
        %v2283 = vsel %vm408, %v2282, %v2253
        %v2284 = vsel %vm410, %v2283, %v2257
        %v2285 = vsel %vm412, %v2284, %v2261
        %v2286 = vsel %vm414, %v2285, %v2265
        %v2287 = vsel %vm416, %v2286, %v2269
        %v2288 = vsel %vm418, %v2287, %v2273
        %v2291 = vrot.slane %v657, 4
        %v2292 = vrot.slane %v664, 4
        %v2297 = vrot.slane %v1126, 4
        %v2298 = vrot.slane %v1133, 4
        %v2303 = vrot.slane %v1586, 4
        %v2304 = vrot.slane %v1593, 4
        %v2309 = vrot.slane %v2051, 4
        %v2310 = vrot.slane %v2058, 4
        %vm2313 = vcmask 1043456
        %v2314 = vsel %vm2313, %v419, %v2291
        %v2315 = vsel %vm2313, %v426, %v2292
        %v2316 = vsel %vm2313, %v887, %v2297
        %v2317 = vsel %vm2313, %v894, %v2298
        %v2318 = vsel %vm2313, %v1356, %v2303
        %v2319 = vsel %vm2313, %v1363, %v2304
        %v2320 = vsel %vm2313, %v1821, %v2309
        %v2321 = vsel %vm2313, %v1828, %v2310
        %2323 = vset.pattern.permute.xlu0 0
        %2324 = vperm.xlu0 %2323, %v201
        %v2325 = vpop.permute.xlu0 %2324
        %vm2327 = vcmask 293888
        %v2329 = vsel %vm2327, %v200, 0
        %v2332 = vsel %vm2313, %v2281, 0
        %v2335 = vsel %vm2313, %v2288, 0
        %2337 = vmatprep.subr.mxu0 0.0
        %2338 = vmatpush1.msra.mxu0 0.0
        %2339 = vmatprep.subr.mxu0 0.0
        %2340 = vmatpush1.msra.mxu0 0.0
        %2341 = vmatprep.subr.mxu0 0.0
        %2342 = vmatpush1.msra.mxu0 0.0
        %2343 = vmatprep.subr.mxu0 0.0
        %2344 = vmatpush1.msra.mxu0 0.0
        %2345 = vmatprep.subr.mxu0 0.0
        %2346 = vmatpush1.msra.mxu0 0.0
        %2347 = vmatprep.subr.mxu0 0.0
        %2348 = vmatpush1.msra.mxu0 0.0
        %2349 = vmatprep.subr.mxu0 0.0
        %2350 = vmatpush1.msra.mxu0 0.0
        %2351 = vmatprep.subr.mxu0 0.0
        %2352 = vmatpush1.msra.mxu0 0.0
        %2353 = vmatprep.subr.mxu0 0.0
        %2354 = vmatpush1.msra.mxu0 0.0
        %2355 = vmatprep.subr.mxu0 0.0
        %2356 = vmatpush1.msra.mxu0 0.0
        %2357 = vmatprep.subr.mxu0 0.0
        %2358 = vmatpush1.msra.mxu0 0.0
        %2359 = vmatprep.subr.mxu0 %v2335
        %2360 = vmatpush1.msra.mxu0 %v2332
        %2361 = vmatprep.subr.mxu0 %v2321
        %2362 = vmatpush1.msra.mxu0 %v2320
        %2363 = vmatprep.subr.mxu0 %v2319
        %2364 = vmatpush1.msra.mxu0 %v2318
        %2365 = vmatprep.subr.mxu0 %v2317
        %2366 = vmatpush1.msra.mxu0 %v2316
        %2367 = vmatprep.subr.mxu0 %v2315
        %2368 = vmatpush1.msra.mxu0 %v2314
        %2369 = vmatprep.subr.mxu0 0.0
        %2370 = vmatpush2.msra.mxu0 0.0
        %2371 = vmatprep.subr.mxu0 0.0
        %2372 = vmatpush2.msra.mxu0 0.0
        %2373 = vmatprep.subr.mxu0 0.0
        %2374 = vmatpush2.msra.mxu0 0.0
        %2375 = vmatprep.subr.mxu0 0.0
        %2376 = vmatpush2.msra.mxu0 0.0
        %2377 = vmatprep.subr.mxu0 0.0
        %2378 = vmatpush2.msra.mxu0 0.0
        %2379 = vmatprep.subr.mxu0 0.0
        %2380 = vmatpush2.msra.mxu0 0.0
        %2381 = vmatprep.subr.mxu0 0.0
        %2382 = vmatpush2.msra.mxu0 0.0
        %2383 = vmatprep.subr.mxu0 0.0
        %2384 = vmatpush2.msra.mxu0 0.0
        %2385 = vmatprep.subr.mxu0 0.0
        %2386 = vmatpush2.msra.mxu0 0.0
        %2387 = vmatprep.subr.mxu0 0.0
        %2388 = vmatpush2.msra.mxu0 0.0
        %2389 = vmatprep.subr.mxu0 0.0
        %2390 = vmatpush2.msra.mxu0 0.0
        %2391 = vmatprep.subr.mxu0 0.0
        %2392 = vmatpush2.msra.mxu0 0.0
        %2393 = vmatprep.subr.mxu0 0.0
        %2394 = vmatpush2.msra.mxu0 0.0
        %2395 = vmatprep.subr.mxu0 0.0
        %2396 = vmatpush2.msra.mxu0 0.0
        %2397 = vmatprep.subr.mxu0 0.0
        %2398 = vmatpush2.msra.mxu0 0.0
        %2399 = vmatprep.subr.mxu0 0.0
        %2400 = vmatpush2.msra.mxu0 0.0
        %2401 = vmatprep.mubr.f32.mxu0 0.0
        %2402 = vmatmul.mubr.f32.gmra.mxu0 %v2329
        %v2403 = vpop.f32.mrf.mxu0
        %v2404 = vadd.f32 %v2325, %v2403
        %v2405 = vpop.f32.mrf.mxu0
        %v2406 = vadd.f32 %v2325, %v2405
        %2407 = vdwg.mxu0
        %2408 = vst [vmem:[%s188] sm:$0xff] %v2404
        %2409 = vst [vmem:[%s188 + $0x8] sm:$0xff] %v2406
        %s2410 = sand.u32 %s107, 1
        %s2411 = scalar_lea.sflag [#allocation5], %s2410
        %s2412 = sand.u32 %s107, 1
        %s2413 = smul.addr %s2412, 16
        %s2414 = scalar_lea.vmem [#allocation4], %s2413
        // Predicated region
        $region33: #{tpu_custom_call.1} parent=31 // pred_check
          %p2415 = pneg %p117
        $region34: #{tpu_custom_call.1} parent=31 // pred_check_branch
          %2417 = sbr.rel (%p2415) target = $region36
        $region35: #{tpu_custom_call.1} parent=31 // pred_region
          %s2419 = ssub.s32 256, 256
          %2420 = vsyncadd %s2411, %s2419
          %s2421 = smul.addr %s24, 2
          %s2422 = smul.addr %s2421, 128
          %s2423 = scalar_lea.hbm %s4, %s2422
          %s2425 = sshll.u32 %s2414, 4
          %s2426 = int_to_ptr.vmem [resolvable:$true] %s2425
          %2428 = dma.vmem_to_hbm [thread:$0]  %s2426, 256, %s2423, %s2411
        $region36: #{tpu_custom_call.1} parent=31 // pred_fallthru
          _
      $region32: #{tpu_custom_call.1} parent=5 // pred_fallthru
        _
      %p2429 = scmp.le.s32.totalorder 2, %s19
      // Predicated region
      $region37: #{tpu_custom_call.1} parent=5 // pred_check
        %p2430 = pneg %p2429
      $region38: #{tpu_custom_call.1} parent=5 // pred_check_branch
        %2432 = sbr.rel (%p2430) target = $region40
      $region39: #{tpu_custom_call.1} parent=5 // pred_region
        %s2433 = ssub.s32 %s19, 2
        // Predicated region
        $region41: #{tpu_custom_call.1} parent=39 // pred_check
          %p2434 = pneg %p123
        $region42: #{tpu_custom_call.1} parent=39 // pred_check_branch
          %2436 = sbr.rel (%p2434) target = $region44
        $region43: #{tpu_custom_call.1} parent=39 // pred_region
          %s2437 = sand.u32 %s108, 1
          %s2438 = scalar_lea.sflag [#allocation5], %s2437
          %s2439 = sand.u32 %s108, 1
          %s2440 = smul.addr %s2439, 16
          %s2441 = scalar_lea.vmem [#allocation4], %s2440
          %2442 = dma.done %s2438, 256
        $region44: #{tpu_custom_call.1} parent=39 // pred_fallthru
          _
      $region40: #{tpu_custom_call.1} parent=5 // pred_fallthru
        _
    $region6: #{tpu_custom_call.1} parent=1 // loop_footer
      %s23 = sadd.s32 1, %s19
    $region7: #{tpu_custom_call.1} parent=1 // loop_footer_branch
      %18 = sbr.rel target = $region3
    $region8: #{tpu_custom_call.1} parent=1 // loop_exit
      _
    %2443 = vsyncpa [#allocation5], 1
    %s2444 = scalar_lea.sflag [#allocation5], 1
    %2445 = vsyncpa %s2444, 1

</llo_original>
